<compile_context>
chip_gen: v6e
topology: v6e:2x2x1
jax: 0.10.0
libtpu: 0.0.40
codegen_flags: <defaults>
</compile_context>

<pallas_src>
import functools

import jax
import jax.numpy as jnp
from jax.experimental import pallas as pl
from jax.experimental.pallas import tpu as pltpu


# --------------------------- Pallas kernel ---------------------------
def _kernel(x_ref, w_emb, w1, w2, wpw, gwi, wc1, wc2, bpack, out_ref):
    f32, bf16 = jnp.float32, jnp.bfloat16
    TB, L, D = x_ref.shape
    L2, L4 = L // 2, L // 4
    E = w_emb.shape[1]
    C1 = w1.shape[2]
    C2 = w2.shape[2]
    C3 = wpw.shape[1]
    H2 = gwi.shape[1] // 3            # 2 * GRU hidden size
    CH = wc1.shape[1]
    NCP = wc2.shape[1]                # lane-padded number of classes

    # --- unpack the packed bias / depthwise-tap buffer (static slices, f32) ---
    b_emb = bpack[0:1, 0:E]
    b1 = bpack[1:2, 0:C1]
    b2 = bpack[2:3, 0:C2]
    bdw = bpack[3:4, 0:C2]
    bpw = bpack[4:5, 0:C3]
    gb_add = bpack[5:6, 0:3 * H2]
    gb_hn = bpack[6:7, 0:H2]
    bc1 = bpack[7:8, 0:CH]
    bc2 = bpack[8:9, 0:NCP]
    wdw = [bpack[9 + k:10 + k, 0:C2] for k in range(3)]

    def shifted(a3, d):
        # Per-sample time shift by d with zero halos; a3: (TB, Lt, C).
        # Halos never leak across samples (shift is within axis 1 only).
        if d == 0:
            return a3
        Lt, C = a3.shape[1], a3.shape[2]
        z = jnp.zeros((TB, abs(d), C), a3.dtype)
        if d > 0:
            return jnp.concatenate([a3[:, d:, :], z], axis=1)
        return jnp.concatenate([z, a3[:, :Lt + d, :]], axis=1)

    # ---- embedding: Linear(D -> E) over all TB*L time steps in one matmul ----
    x = x_ref[...].reshape(TB * L, D).astype(bf16)
    e = jnp.dot(x, w_emb[...], preferred_element_type=f32) + b_emb        # (TB*L, E)
    e3 = e.reshape(TB, L, E)

    # ---- block 1: Conv1d(E->C1, k=5, p=2) [BN folded] + ReLU + MaxPool(2) ----
    acc1 = b1
    for k in range(5):
        tap = shifted(e3, k - 2).reshape(TB * L, E).astype(bf16)
        acc1 = acc1 + jnp.dot(tap, w1[k], preferred_element_type=f32)
    p1 = jnp.max(jnp.maximum(acc1, 0.0).reshape(TB * L2, 2, C1), axis=1)  # (TB*L2, C1)

    # ---- block 2: Conv1d(C1->C2, k=3, p=1) [BN folded] + ReLU + MaxPool(2) ----
    p1_3 = p1.reshape(TB, L2, C1)
    acc2 = b2
    for k in range(3):
        tap = shifted(p1_3, k - 1).reshape(TB * L2, C1).astype(bf16)
        acc2 = acc2 + jnp.dot(tap, w2[k], preferred_element_type=f32)
    p2 = jnp.max(jnp.maximum(acc2, 0.0).reshape(TB * L4, 2, C2), axis=1)  # (TB*L4, C2)

    # ---- depthwise Conv1d(C2, g=C2, k=3, p=1) + pointwise (C2->C3) [BN folded] + ReLU ----
    p2_3 = p2.reshape(TB, L4, C2)
    ydw = bdw
    for k in range(3):
        ydw = ydw + shifted(p2_3, k - 1).reshape(TB * L4, C2) * wdw[k]
    ypw = jnp.maximum(
        jnp.dot(ydw.astype(bf16), wpw[...], preferred_element_type=f32) + bpw, 0.0)

    # ---- AdaptiveAvgPool1d(1): per-sample mean over time ----
    v = jnp.mean(ypw.reshape(TB, L4, C3), axis=1)                         # (TB, C3)

    # ---- bidirectional GRU, seq len 1, h0 = 0: all 6 gates in one matmul ----
    gates = jnp.dot(v.astype(bf16), gwi[...], preferred_element_type=f32) + gb_add
    r = jax.nn.sigmoid(gates[:, 0:H2])
    z = jax.nn.sigmoid(gates[:, H2:2 * H2])
    n = jnp.tanh(gates[:, 2 * H2:3 * H2] + r * gb_hn)
    gru_out = (1.0 - z) * n                                               # (TB, H2) = [fwd | bwd]

    # Attention over a length-1 sequence is exactly the identity: context == gru_out.

    # ---- classifier: Linear + ReLU + Linear (lane-padded to NCP columns) ----
    h1 = jnp.maximum(
        jnp.dot(gru_out.astype(bf16), wc1[...], preferred_element_type=f32) + bc1, 0.0)
    out_ref[...] = (jnp.dot(h1.astype(bf16), wc2[...], preferred_element_type=f32)
                    + bc2).astype(out_ref.dtype)


# --------------------- host-side param folding / packing ---------------------
def _pack_kernel_params(P, ncp):
    f32, bf16 = jnp.float32, jnp.bfloat16
    C1 = P["w1"].shape[2]
    C2 = P["w2"].shape[2]
    NC = P["wc2"].shape[1]

    # fold eval-mode BatchNorm into the preceding conv / pointwise layers
    w1 = P["w1"] * P["bn1s"].reshape(1, 1, C1)                            # (5, E, C1)
    b1 = P["b1"] * P["bn1s"] + P["bn1b"]
    w2 = P["w2"] * P["bn2s"].reshape(1, 1, C2)                            # (3, C1, C2)
    b2 = P["b2"] * P["bn2s"] + P["bn2b"]
    wpw = P["wpw"] * P["bn3s"]
    bpw = P["bpw"] * P["bn3s"] + P["bn3b"]

    # pack bidirectional GRU input weights / biases (seq len 1, h0 = 0)
    gwi = jnp.concatenate(
        [P["gwi_f"][0], P["gwi_b"][0],
         P["gwi_f"][1], P["gwi_b"][1],
         P["gwi_f"][2], P["gwi_b"][2]], axis=1)                           # (C3, 6H)
    gb_add = jnp.concatenate(
        [P["gb_f"][0], P["gb_b"][0],
         P["gb_f"][1], P["gb_b"][1],
         P["gb_f"][2], P["gb_b"][2]], axis=0)                             # (6H,)
    gb_hn = jnp.concatenate([P["gb_f"][3], P["gb_b"][3]], axis=0)         # (2H,)

    # lane-dense classifier output: pad to ncp output columns
    wc2 = jnp.pad(P["wc2"], ((0, 0), (0, ncp - NC)))
    bc2 = jnp.pad(P["bc2"].reshape(-1), (0, ncp - NC))

    # pack all small per-channel vectors + depthwise taps into one f32 buffer
    rows = [P["b_emb"], b1, b2, P["bdw"], bpw, gb_add, gb_hn,
            P["bc1"], bc2, P["wdw"][0], P["wdw"][1], P["wdw"][2]]
    rows = [r.reshape(-1).astype(f32) for r in rows]
    maxw = max(int(r.shape[0]) for r in rows)
    bpack = jnp.stack([jnp.pad(r, (0, maxw - r.shape[0])) for r in rows])  # (12, maxw)

    mats = [P["w_emb"], w1, w2, wpw, gwi, P["wc1"], wc2]
    return [m.astype(bf16) for m in mats] + [bpack]


def _vmem_limit_bytes():
    cap = 64 * 1024 * 1024                      # conservative fallback (v7x physical)
    try:
        cap = int(pltpu.get_tpu_info().vmem_capacity_bytes)
    except Exception:
        pass
    # leave headroom; clamp to safe range across v5e/v6e (128 MiB) and v7x (64 MiB)
    return int(min(max(cap * 3 // 4, 32 * 1024 * 1024), 100 * 1024 * 1024))


def _choose_batch_tile(B, cap):
    # divisors of B that are multiples of 8 and fit the per-generation cap
    cands = [d for d in range(8, min(B, cap) + 1, 8) if B % d == 0]
    if not cands:
        return B                                 # tiny / awkward batch: single step
    tb = max(cands)
    if tb == B:                                  # prefer >= 2 grid steps (v7x megacore)
        smaller = [d for d in cands if d < B]
        if smaller:
            tb = max(smaller)
    return tb


def light_pulse_classifier(x, params, *, batch_tile=None):
    B, L, D = x.shape
    assert L % 4 == 0, "sequence length must be divisible by 4 (two MaxPool(2))"
    NC = params["wc2"].shape[1]
    E = params["w_emb"].shape[1]
    C1 = params["w1"].shape[2]
    C2 = params["w2"].shape[2]
    C3 = params["wpw"].shape[1]
    NCP = max(128, pl.cdiv(NC, 128) * 128)       # lane-dense output width

    plist = _pack_kernel_params(params, NCP)
    vmem_limit = _vmem_limit_bytes()

    # rough per-sample live-VMEM estimate (f32-dominated temporaries)
    per_sample = 4 * (6 * L * E + 4 * L * C1 + 4 * (L // 2) * C2 + 4 * (L // 4) * C3)
    cap = max(8, min(1024, (vmem_limit // (3 * max(per_sample, 1))) // 8 * 8))

    if batch_tile is not None and B % batch_tile == 0 and \
            (batch_tile % 8 == 0 or batch_tile == B):
        TB = batch_tile
    else:
        TB = _choose_batch_tile(B, cap)
    assert B % TB == 0

    def _const_spec(p):
        zeros = (0,) * p.ndim
        return pl.BlockSpec(p.shape, lambda g, z=zeros: z)

    in_specs = [pl.BlockSpec((TB, L, D), lambda g: (g, 0, 0))]
    in_specs += [_const_spec(p) for p in plist]
    out_spec = pl.BlockSpec((TB, NCP), lambda g: (g, 0))

    out = pl.pallas_call(
        _kernel,
        out_shape=jax.ShapeDtypeStruct((B, NCP), jnp.float32),
        grid_spec=pltpu.PrefetchScalarGridSpec(
            num_scalar_prefetch=0,
            grid=(B // TB,),
            in_specs=in_specs,
            out_specs=out_spec,
        ),
        compiler_params=pltpu.CompilerParams(
            dimension_semantics=("parallel",),
            vmem_limit_bytes=vmem_limit),
    )(x.astype(jnp.float32), *plist)
    return out[:, :NC]


# ---------------- pure-JAX reference (faithful, incl. attention) ----------------
def _ref_single(x, P):
    def conv(inp, w, b, pad):
        K, Lc = w.shape[0], inp.shape[0]
        xp = jnp.pad(inp, ((pad, pad), (0, 0)))
        y = b
        for k in range(K):
            y = y + xp[k:k + Lc] @ w[k]
        return y

    e = x @ P["w_emb"] + P["b_emb"]
    y1 = jnp.maximum(conv(e, P["w1"], P["b1"], 2) * P["bn1s"] + P["bn1b"], 0.0)
    p1 = y1.reshape(y1.shape[0] // 2, 2, y1.shape[1]).max(axis=1)
    y2 = jnp.maximum(conv(p1, P["w2"], P["b2"], 1) * P["bn2s"] + P["bn2b"], 0.0)
    p2 = y2.reshape(y2.shape[0] // 2, 2, y2.shape[1]).max(axis=1)
    L4 = p2.shape[0]
    xp = jnp.pad(p2, ((1, 1), (0, 0)))
    ydw = P["bdw"]
    for k in range(3):
        ydw = ydw + xp[k:k + L4] * P["wdw"][k:k + 1]
    ypw = jnp.maximum((ydw @ P["wpw"] + P["bpw"]) * P["bn3s"] + P["bn3b"], 0.0)
    v = jnp.mean(ypw, axis=0, keepdims=True)

    def gru_dir(wi, gb):
        r = jax.nn.sigmoid(v @ wi[0] + gb[0:1])
        z = jax.nn.sigmoid(v @ wi[1] + gb[1:2])
        n = jnp.tanh(v @ wi[2] + gb[2:3] + r * gb[3:4])
        return (1.0 - z) * n

    gru_out = jnp.concatenate(
        [gru_dir(P["gwi_f"], P["gb_f"]), gru_dir(P["gwi_b"], P["gb_b"])], axis=-1)
    a1 = jnp.tanh(gru_out @ P["wa1"] + P["ba1"])
    score = a1 @ P["wa2"] + P["ba2"]
    attn = jax.nn.softmax(score, axis=0)
    context = jnp.sum(attn * gru_out, axis=0, keepdims=True)
    h1 = jnp.maximum(context @ P["wc1"] + P["bc1"], 0.0)
    return (h1 @ P["wc2"] + P["bc2"])[0]


# ------------------------- deterministic params -------------------------
def make_params(key, D, E, NC):
    ks = jax.random.split(key, 16)
    f32 = jnp.float32

    def kaiming(k, shape, fan):
        return jax.random.normal(k, shape, f32) * jnp.sqrt(2.0 / fan)

    def unif(k, shape, a):
        return jax.random.uniform(k, shape, f32, -a, a)

    bn_scale = lambda c: jnp.full((1, c), 1.0 / jnp.sqrt(1.0 + 1e-5), f32)
    H = 64
    return {
        "w_emb": kaiming(ks[0], (D, E), D),
        "b_emb": jnp.zeros((1, E), f32),
        "w1": kaiming(ks[1], (5, E, 32), 32 * 5),       # fan_out
        "b1": jnp.zeros((1, 32), f32),
        "bn1s": bn_scale(32), "bn1b": jnp.zeros((1, 32), f32),
        "w2": kaiming(ks[2], (3, 32, 64), 64 * 3),
        "b2": jnp.zeros((1, 64), f32),
        "bn2s": bn_scale(64), "bn2b": jnp.zeros((1, 64), f32),
        "wdw": kaiming(ks[3], (3, 64), 64 * 3),
        "bdw": jnp.zeros((1, 64), f32),
        "wpw": kaiming(ks[4], (64, 128), 128),
        "bpw": jnp.zeros((1, 128), f32),
        "bn3s": bn_scale(128), "bn3b": jnp.zeros((1, 128), f32),
        "gwi_f": unif(ks[5], (3, 128, H), 1.0 / jnp.sqrt(H)),
        "gb_f": unif(ks[6], (4, H), 1.0 / jnp.sqrt(H)),
        "gwi_b": unif(ks[7], (3, 128, H), 1.0 / jnp.sqrt(H)),
        "gb_b": unif(ks[8], (4, H), 1.0 / jnp.sqrt(H)),
        "wa1": kaiming(ks[9], (128, 32), 128),
        "ba1": jnp.zeros((1, 32), f32),
        "wa2": kaiming(ks[10], (32, 1), 32),
        "ba2": jnp.zeros((1, 1), f32),
        "wc1": kaiming(ks[11], (128, 64), 128),
        "bc1": jnp.zeros((1, 64), f32),
        "wc2": kaiming(ks[12], (64, NC), 64),
        "bc2": jnp.zeros((1, NC), f32),
    }


if __name__ == "__main__":
    B, L, D, E, NC = 2, 16, 16, 32, 5   # batch, seq_len, input_size, embed_size, num_classes
    key = jax.random.PRNGKey(0)
    pkey, xkey = jax.random.split(key)
    params = make_params(pkey, D, E, NC)
    x = jax.random.normal(xkey, (B, L, D), jnp.float32)

    out = jax.block_until_ready(light_pulse_classifier(x, params))

    ref = jax.block_until_ready(
        jax.vmap(functools.partial(_ref_single, P=params))(x))
    if out.shape != (B, NC) or not jnp.allclose(out, ref, atol=5e-2, rtol=5e-2):
        raise RuntimeError("Pallas kernel does not match reference")
    print("KERNEL_OK")
</pallas_src>

<mosaic_0001>
module attributes {stable_mosaic.version = 11 : i64} {
  func.func @_kernel(%arg0: i32, %arg1: memref<2x16x16xf32, #tpu.memory_space<vmem>>, %arg2: memref<16x32xbf16, #tpu.memory_space<vmem>>, %arg3: memref<5x32x32xbf16, #tpu.memory_space<vmem>>, %arg4: memref<3x32x64xbf16, #tpu.memory_space<vmem>>, %arg5: memref<64x128xbf16, #tpu.memory_space<vmem>>, %arg6: memref<128x384xbf16, #tpu.memory_space<vmem>>, %arg7: memref<128x64xbf16, #tpu.memory_space<vmem>>, %arg8: memref<64x128xbf16, #tpu.memory_space<vmem>>, %arg9: memref<12x384xf32, #tpu.memory_space<vmem>>, %arg10: memref<2x128xf32, #tpu.memory_space<vmem>>) attributes {dimension_semantics = [#tpu.dimension_semantics<parallel>], iteration_bounds = array<i64: 1>, scalar_prefetch = 0 : i64, scratch_operands = 0 : i64, tpu.core_type = #tpu.core_type<tc>, window_params = [{transform_indices = @transform_0, window_bounds = array<i64: 2, 16, 16>}, {pipeline_mode = #tpu.pipeline_mode<synchronous>, transform_indices = @transform_1, window_bounds = array<i64: 16, 32>}, {pipeline_mode = #tpu.pipeline_mode<synchronous>, transform_indices = @transform_2, window_bounds = array<i64: 5, 32, 32>}, {pipeline_mode = #tpu.pipeline_mode<synchronous>, transform_indices = @transform_3, window_bounds = array<i64: 3, 32, 64>}, {pipeline_mode = #tpu.pipeline_mode<synchronous>, transform_indices = @transform_4, window_bounds = array<i64: 64, 128>}, {pipeline_mode = #tpu.pipeline_mode<synchronous>, transform_indices = @transform_5, window_bounds = array<i64: 128, 384>}, {pipeline_mode = #tpu.pipeline_mode<synchronous>, transform_indices = @transform_6, window_bounds = array<i64: 128, 64>}, {pipeline_mode = #tpu.pipeline_mode<synchronous>, transform_indices = @transform_7, window_bounds = array<i64: 64, 128>}, {pipeline_mode = #tpu.pipeline_mode<synchronous>, transform_indices = @transform_8, window_bounds = array<i64: 12, 384>}, {transform_indices = @transform_9, window_bounds = array<i64: 2, 128>}]} {
    %c0 = arith.constant 0 : index
    %c0_0 = arith.constant 0 : index
    %0 = vector.load %arg9[%c0, %c0_0] : memref<12x384xf32, #tpu.memory_space<vmem>>, vector<1x32xf32>
    %c1 = arith.constant 1 : index
    %c0_1 = arith.constant 0 : index
    %1 = vector.load %arg9[%c1, %c0_1] : memref<12x384xf32, #tpu.memory_space<vmem>>, vector<1x32xf32>
    %c2 = arith.constant 2 : index
    %c0_2 = arith.constant 0 : index
    %2 = vector.load %arg9[%c2, %c0_2] : memref<12x384xf32, #tpu.memory_space<vmem>>, vector<1x64xf32>
    %c3 = arith.constant 3 : index
    %c0_3 = arith.constant 0 : index
    %3 = vector.load %arg9[%c3, %c0_3] : memref<12x384xf32, #tpu.memory_space<vmem>>, vector<1x64xf32>
    %c4 = arith.constant 4 : index
    %c0_4 = arith.constant 0 : index
    %4 = vector.load %arg9[%c4, %c0_4] : memref<12x384xf32, #tpu.memory_space<vmem>>, vector<1x128xf32>
    %c5 = arith.constant 5 : index
    %c0_5 = arith.constant 0 : index
    %5 = vector.load %arg9[%c5, %c0_5] : memref<12x384xf32, #tpu.memory_space<vmem>>, vector<1x384xf32>
    %c6 = arith.constant 6 : index
    %c0_6 = arith.constant 0 : index
    %6 = vector.load %arg9[%c6, %c0_6] : memref<12x384xf32, #tpu.memory_space<vmem>>, vector<1x128xf32>
    %c7 = arith.constant 7 : index
    %c0_7 = arith.constant 0 : index
    %7 = vector.load %arg9[%c7, %c0_7] : memref<12x384xf32, #tpu.memory_space<vmem>>, vector<1x64xf32>
    %c8 = arith.constant 8 : index
    %c0_8 = arith.constant 0 : index
    %8 = vector.load %arg9[%c8, %c0_8] : memref<12x384xf32, #tpu.memory_space<vmem>>, vector<1x128xf32>
    %c9 = arith.constant 9 : index
    %c0_9 = arith.constant 0 : index
    %9 = vector.load %arg9[%c9, %c0_9] : memref<12x384xf32, #tpu.memory_space<vmem>>, vector<1x64xf32>
    %c10 = arith.constant 10 : index
    %c0_10 = arith.constant 0 : index
    %10 = vector.load %arg9[%c10, %c0_10] : memref<12x384xf32, #tpu.memory_space<vmem>>, vector<1x64xf32>
    %c11 = arith.constant 11 : index
    %c0_11 = arith.constant 0 : index
    %11 = vector.load %arg9[%c11, %c0_11] : memref<12x384xf32, #tpu.memory_space<vmem>>, vector<1x64xf32>
    %c0_12 = arith.constant 0 : index
    %c0_13 = arith.constant 0 : index
    %c0_14 = arith.constant 0 : index
    %12 = vector.load %arg1[%c0_12, %c0_13, %c0_14] : memref<2x16x16xf32, #tpu.memory_space<vmem>>, vector<2x16x16xf32>
    %13 = vector.shape_cast %12 : vector<2x16x16xf32> to vector<32x16xf32>
    %14 = arith.truncf %13 : vector<32x16xf32> to vector<32x16xbf16>
    %c0_15 = arith.constant 0 : index
    %c0_16 = arith.constant 0 : index
    %15 = vector.load %arg2[%c0_15, %c0_16] : memref<16x32xbf16, #tpu.memory_space<vmem>>, vector<16x32xbf16>
    %cst = arith.constant dense<0.000000e+00> : vector<32x32xf32>
    %16 = tpu.matmul %14, %15, %cst {dimension_numbers = #tpu.dot_dimension_numbers<[1], [0], [0], [1], [0, 0, 1, 1], [], []>} : vector<32x16xbf16>, vector<16x32xbf16>, vector<32x32xf32> -> vector<32x32xf32>
    %17 = vector.broadcast %0 : vector<1x32xf32> to vector<32x32xf32>
    %18 = arith.addf %16, %17 : vector<32x32xf32>
    %19 = vector.shape_cast %18 : vector<32x32xf32> to vector<2x16x32xf32>
    %cst_17 = arith.constant 0.000000e+00 : f32
    %20 = vector.broadcast %cst_17 : f32 to vector<2x2x32xf32>
    %21 = vector.extract_strided_slice %19 {offsets = [0, 0, 0], sizes = [2, 14, 32], strides = [1, 1, 1]} : vector<2x16x32xf32> to vector<2x14x32xf32>
    %22 = tpu.concatenate %20, %21 in 1 : vector<2x2x32xf32>, vector<2x14x32xf32> -> vector<2x16x32xf32>
    %23 = vector.shape_cast %22 : vector<2x16x32xf32> to vector<32x32xf32>
    %24 = arith.truncf %23 : vector<32x32xf32> to vector<32x32xbf16>
    %c0_18 = arith.constant 0 : index
    %c0_19 = arith.constant 0 : index
    %c0_20 = arith.constant 0 : index
    %25 = vector.load %arg3[%c0_18, %c0_19, %c0_20] : memref<5x32x32xbf16, #tpu.memory_space<vmem>>, vector<1x32x32xbf16>
    %26 = vector.shape_cast %25 : vector<1x32x32xbf16> to vector<32x32xbf16>
    %cst_21 = arith.constant dense<0.000000e+00> : vector<32x32xf32>
    %27 = tpu.matmul %24, %26, %cst_21 {dimension_numbers = #tpu.dot_dimension_numbers<[1], [0], [0], [1], [0, 0, 1, 1], [], []>} : vector<32x32xbf16>, vector<32x32xbf16>, vector<32x32xf32> -> vector<32x32xf32>
    %28 = vector.broadcast %1 : vector<1x32xf32> to vector<32x32xf32>
    %29 = arith.addf %28, %27 : vector<32x32xf32>
    %cst_22 = arith.constant 0.000000e+00 : f32
    %30 = vector.broadcast %cst_22 : f32 to vector<2x1x32xf32>
    %31 = vector.extract_strided_slice %19 {offsets = [0, 0, 0], sizes = [2, 15, 32], strides = [1, 1, 1]} : vector<2x16x32xf32> to vector<2x15x32xf32>
    %32 = tpu.concatenate %30, %31 in 1 : vector<2x1x32xf32>, vector<2x15x32xf32> -> vector<2x16x32xf32>
    %33 = vector.shape_cast %32 : vector<2x16x32xf32> to vector<32x32xf32>
    %34 = arith.truncf %33 : vector<32x32xf32> to vector<32x32xbf16>
    %c1_23 = arith.constant 1 : index
    %c0_24 = arith.constant 0 : index
    %c0_25 = arith.constant 0 : index
    %35 = vector.load %arg3[%c1_23, %c0_24, %c0_25] : memref<5x32x32xbf16, #tpu.memory_space<vmem>>, vector<1x32x32xbf16>
    %36 = vector.shape_cast %35 : vector<1x32x32xbf16> to vector<32x32xbf16>
    %cst_26 = arith.constant dense<0.000000e+00> : vector<32x32xf32>
    %37 = tpu.matmul %34, %36, %cst_26 {dimension_numbers = #tpu.dot_dimension_numbers<[1], [0], [0], [1], [0, 0, 1, 1], [], []>} : vector<32x32xbf16>, vector<32x32xbf16>, vector<32x32xf32> -> vector<32x32xf32>
    %38 = arith.addf %29, %37 : vector<32x32xf32>
    %39 = vector.shape_cast %19 : vector<2x16x32xf32> to vector<32x32xf32>
    %40 = arith.truncf %39 : vector<32x32xf32> to vector<32x32xbf16>
    %c2_27 = arith.constant 2 : index
    %c0_28 = arith.constant 0 : index
    %c0_29 = arith.constant 0 : index
    %41 = vector.load %arg3[%c2_27, %c0_28, %c0_29] : memref<5x32x32xbf16, #tpu.memory_space<vmem>>, vector<1x32x32xbf16>
    %42 = vector.shape_cast %41 : vector<1x32x32xbf16> to vector<32x32xbf16>
    %cst_30 = arith.constant dense<0.000000e+00> : vector<32x32xf32>
    %43 = tpu.matmul %40, %42, %cst_30 {dimension_numbers = #tpu.dot_dimension_numbers<[1], [0], [0], [1], [0, 0, 1, 1], [], []>} : vector<32x32xbf16>, vector<32x32xbf16>, vector<32x32xf32> -> vector<32x32xf32>
    %44 = arith.addf %38, %43 : vector<32x32xf32>
    %cst_31 = arith.constant 0.000000e+00 : f32
    %45 = vector.broadcast %cst_31 : f32 to vector<2x1x32xf32>
    %46 = vector.extract_strided_slice %19 {offsets = [0, 1, 0], sizes = [2, 15, 32], strides = [1, 1, 1]} : vector<2x16x32xf32> to vector<2x15x32xf32>
    %47 = tpu.concatenate %46, %45 in 1 : vector<2x15x32xf32>, vector<2x1x32xf32> -> vector<2x16x32xf32>
    %48 = vector.shape_cast %47 : vector<2x16x32xf32> to vector<32x32xf32>
    %49 = arith.truncf %48 : vector<32x32xf32> to vector<32x32xbf16>
    %c3_32 = arith.constant 3 : index
    %c0_33 = arith.constant 0 : index
    %c0_34 = arith.constant 0 : index
    %50 = vector.load %arg3[%c3_32, %c0_33, %c0_34] : memref<5x32x32xbf16, #tpu.memory_space<vmem>>, vector<1x32x32xbf16>
    %51 = vector.shape_cast %50 : vector<1x32x32xbf16> to vector<32x32xbf16>
    %cst_35 = arith.constant dense<0.000000e+00> : vector<32x32xf32>
    %52 = tpu.matmul %49, %51, %cst_35 {dimension_numbers = #tpu.dot_dimension_numbers<[1], [0], [0], [1], [0, 0, 1, 1], [], []>} : vector<32x32xbf16>, vector<32x32xbf16>, vector<32x32xf32> -> vector<32x32xf32>
    %53 = arith.addf %44, %52 : vector<32x32xf32>
    %cst_36 = arith.constant 0.000000e+00 : f32
    %54 = vector.broadcast %cst_36 : f32 to vector<2x2x32xf32>
    %55 = vector.extract_strided_slice %19 {offsets = [0, 2, 0], sizes = [2, 14, 32], strides = [1, 1, 1]} : vector<2x16x32xf32> to vector<2x14x32xf32>
    %56 = tpu.concatenate %55, %54 in 1 : vector<2x14x32xf32>, vector<2x2x32xf32> -> vector<2x16x32xf32>
    %57 = vector.shape_cast %56 : vector<2x16x32xf32> to vector<32x32xf32>
    %58 = arith.truncf %57 : vector<32x32xf32> to vector<32x32xbf16>
    %c4_37 = arith.constant 4 : index
    %c0_38 = arith.constant 0 : index
    %c0_39 = arith.constant 0 : index
    %59 = vector.load %arg3[%c4_37, %c0_38, %c0_39] : memref<5x32x32xbf16, #tpu.memory_space<vmem>>, vector<1x32x32xbf16>
    %60 = vector.shape_cast %59 : vector<1x32x32xbf16> to vector<32x32xbf16>
    %cst_40 = arith.constant dense<0.000000e+00> : vector<32x32xf32>
    %61 = tpu.matmul %58, %60, %cst_40 {dimension_numbers = #tpu.dot_dimension_numbers<[1], [0], [0], [1], [0, 0, 1, 1], [], []>} : vector<32x32xbf16>, vector<32x32xbf16>, vector<32x32xf32> -> vector<32x32xf32>
    %62 = arith.addf %53, %61 : vector<32x32xf32>
    %cst_41 = arith.constant 0.000000e+00 : f32
    %63 = vector.broadcast %cst_41 : f32 to vector<32x32xf32>
    %64 = arith.maximumf %62, %63 : vector<32x32xf32>
    %65 = vector.shape_cast %64 : vector<32x32xf32> to vector<16x2x32xf32>
    %cst_42 = arith.constant dense<0xFF800000> : vector<16x32xf32>
    %66 = vector.multi_reduction <maximumf>, %65, %cst_42 [1] : vector<16x2x32xf32> to vector<16x32xf32>
    %67 = vector.shape_cast %66 : vector<16x32xf32> to vector<2x8x32xf32>
    %cst_43 = arith.constant 0.000000e+00 : f32
    %68 = vector.broadcast %cst_43 : f32 to vector<2x1x32xf32>
    %69 = vector.extract_strided_slice %67 {offsets = [0, 0, 0], sizes = [2, 7, 32], strides = [1, 1, 1]} : vector<2x8x32xf32> to vector<2x7x32xf32>
    %70 = tpu.concatenate %68, %69 in 1 : vector<2x1x32xf32>, vector<2x7x32xf32> -> vector<2x8x32xf32>
    %71 = vector.shape_cast %70 : vector<2x8x32xf32> to vector<16x32xf32>
    %72 = arith.truncf %71 : vector<16x32xf32> to vector<16x32xbf16>
    %c0_44 = arith.constant 0 : index
    %c0_45 = arith.constant 0 : index
    %c0_46 = arith.constant 0 : index
    %73 = vector.load %arg4[%c0_44, %c0_45, %c0_46] : memref<3x32x64xbf16, #tpu.memory_space<vmem>>, vector<1x32x64xbf16>
    %74 = vector.shape_cast %73 : vector<1x32x64xbf16> to vector<32x64xbf16>
    %cst_47 = arith.constant dense<0.000000e+00> : vector<16x64xf32>
    %75 = tpu.matmul %72, %74, %cst_47 {dimension_numbers = #tpu.dot_dimension_numbers<[1], [0], [0], [1], [0, 0, 1, 1], [], []>} : vector<16x32xbf16>, vector<32x64xbf16>, vector<16x64xf32> -> vector<16x64xf32>
    %76 = vector.broadcast %2 : vector<1x64xf32> to vector<16x64xf32>
    %77 = arith.addf %76, %75 : vector<16x64xf32>
    %78 = vector.shape_cast %67 : vector<2x8x32xf32> to vector<16x32xf32>
    %79 = arith.truncf %78 : vector<16x32xf32> to vector<16x32xbf16>
    %c1_48 = arith.constant 1 : index
    %c0_49 = arith.constant 0 : index
    %c0_50 = arith.constant 0 : index
    %80 = vector.load %arg4[%c1_48, %c0_49, %c0_50] : memref<3x32x64xbf16, #tpu.memory_space<vmem>>, vector<1x32x64xbf16>
    %81 = vector.shape_cast %80 : vector<1x32x64xbf16> to vector<32x64xbf16>
    %cst_51 = arith.constant dense<0.000000e+00> : vector<16x64xf32>
    %82 = tpu.matmul %79, %81, %cst_51 {dimension_numbers = #tpu.dot_dimension_numbers<[1], [0], [0], [1], [0, 0, 1, 1], [], []>} : vector<16x32xbf16>, vector<32x64xbf16>, vector<16x64xf32> -> vector<16x64xf32>
    %83 = arith.addf %77, %82 : vector<16x64xf32>
    %cst_52 = arith.constant 0.000000e+00 : f32
    %84 = vector.broadcast %cst_52 : f32 to vector<2x1x32xf32>
    %85 = vector.extract_strided_slice %67 {offsets = [0, 1, 0], sizes = [2, 7, 32], strides = [1, 1, 1]} : vector<2x8x32xf32> to vector<2x7x32xf32>
    %86 = tpu.concatenate %85, %84 in 1 : vector<2x7x32xf32>, vector<2x1x32xf32> -> vector<2x8x32xf32>
    %87 = vector.shape_cast %86 : vector<2x8x32xf32> to vector<16x32xf32>
    %88 = arith.truncf %87 : vector<16x32xf32> to vector<16x32xbf16>
    %c2_53 = arith.constant 2 : index
    %c0_54 = arith.constant 0 : index
    %c0_55 = arith.constant 0 : index
    %89 = vector.load %arg4[%c2_53, %c0_54, %c0_55] : memref<3x32x64xbf16, #tpu.memory_space<vmem>>, vector<1x32x64xbf16>
    %90 = vector.shape_cast %89 : vector<1x32x64xbf16> to vector<32x64xbf16>
    %cst_56 = arith.constant dense<0.000000e+00> : vector<16x64xf32>
    %91 = tpu.matmul %88, %90, %cst_56 {dimension_numbers = #tpu.dot_dimension_numbers<[1], [0], [0], [1], [0, 0, 1, 1], [], []>} : vector<16x32xbf16>, vector<32x64xbf16>, vector<16x64xf32> -> vector<16x64xf32>
    %92 = arith.addf %83, %91 : vector<16x64xf32>
    %cst_57 = arith.constant 0.000000e+00 : f32
    %93 = vector.broadcast %cst_57 : f32 to vector<16x64xf32>
    %94 = arith.maximumf %92, %93 : vector<16x64xf32>
    %95 = vector.shape_cast %94 : vector<16x64xf32> to vector<8x2x64xf32>
    %cst_58 = arith.constant dense<0xFF800000> : vector<8x64xf32>
    %96 = vector.multi_reduction <maximumf>, %95, %cst_58 [1] : vector<8x2x64xf32> to vector<8x64xf32>
    %97 = vector.shape_cast %96 : vector<8x64xf32> to vector<2x4x64xf32>
    %cst_59 = arith.constant 0.000000e+00 : f32
    %98 = vector.broadcast %cst_59 : f32 to vector<2x1x64xf32>
    %99 = vector.extract_strided_slice %97 {offsets = [0, 0, 0], sizes = [2, 3, 64], strides = [1, 1, 1]} : vector<2x4x64xf32> to vector<2x3x64xf32>
    %100 = tpu.concatenate %98, %99 in 1 : vector<2x1x64xf32>, vector<2x3x64xf32> -> vector<2x4x64xf32>
    %101 = vector.shape_cast %100 : vector<2x4x64xf32> to vector<8x64xf32>
    %102 = vector.broadcast %9 : vector<1x64xf32> to vector<8x64xf32>
    %103 = arith.mulf %101, %102 : vector<8x64xf32>
    %104 = vector.broadcast %3 : vector<1x64xf32> to vector<8x64xf32>
    %105 = arith.addf %104, %103 : vector<8x64xf32>
    %106 = vector.shape_cast %97 : vector<2x4x64xf32> to vector<8x64xf32>
    %107 = vector.broadcast %10 : vector<1x64xf32> to vector<8x64xf32>
    %108 = arith.mulf %106, %107 : vector<8x64xf32>
    %109 = arith.addf %105, %108 : vector<8x64xf32>
    %cst_60 = arith.constant 0.000000e+00 : f32
    %110 = vector.broadcast %cst_60 : f32 to vector<2x1x64xf32>
    %111 = vector.extract_strided_slice %97 {offsets = [0, 1, 0], sizes = [2, 3, 64], strides = [1, 1, 1]} : vector<2x4x64xf32> to vector<2x3x64xf32>
    %112 = tpu.concatenate %111, %110 in 1 : vector<2x3x64xf32>, vector<2x1x64xf32> -> vector<2x4x64xf32>
    %113 = vector.shape_cast %112 : vector<2x4x64xf32> to vector<8x64xf32>
    %114 = vector.broadcast %11 : vector<1x64xf32> to vector<8x64xf32>
    %115 = arith.mulf %113, %114 : vector<8x64xf32>
    %116 = arith.addf %109, %115 : vector<8x64xf32>
    %117 = arith.truncf %116 : vector<8x64xf32> to vector<8x64xbf16>
    %c0_61 = arith.constant 0 : index
    %c0_62 = arith.constant 0 : index
    %118 = vector.load %arg5[%c0_61, %c0_62] : memref<64x128xbf16, #tpu.memory_space<vmem>>, vector<64x128xbf16>
    %cst_63 = arith.constant dense<0.000000e+00> : vector<8x128xf32>
    %119 = tpu.matmul %117, %118, %cst_63 {dimension_numbers = #tpu.dot_dimension_numbers<[1], [0], [0], [1], [0, 0, 1, 1], [], []>} : vector<8x64xbf16>, vector<64x128xbf16>, vector<8x128xf32> -> vector<8x128xf32>
    %120 = vector.broadcast %4 : vector<1x128xf32> to vector<8x128xf32>
    %121 = arith.addf %119, %120 : vector<8x128xf32>
    %cst_64 = arith.constant 0.000000e+00 : f32
    %122 = vector.broadcast %cst_64 : f32 to vector<8x128xf32>
    %123 = arith.maximumf %121, %122 : vector<8x128xf32>
    %124 = vector.shape_cast %123 : vector<8x128xf32> to vector<2x4x128xf32>
    %cst_65 = arith.constant dense<0.000000e+00> : vector<2x128xf32>
    %125 = vector.multi_reduction <add>, %124, %cst_65 [1] : vector<2x4x128xf32> to vector<2x128xf32>
    %cst_66 = arith.constant 4.000000e+00 : f32
    %126 = vector.broadcast %cst_66 : f32 to vector<2x128xf32>
    %127 = arith.divf %125, %126 : vector<2x128xf32>
    %128 = arith.truncf %127 : vector<2x128xf32> to vector<2x128xbf16>
    %c0_67 = arith.constant 0 : index
    %c0_68 = arith.constant 0 : index
    %129 = vector.load %arg6[%c0_67, %c0_68] : memref<128x384xbf16, #tpu.memory_space<vmem>>, vector<128x384xbf16>
    %cst_69 = arith.constant dense<0.000000e+00> : vector<2x384xf32>
    %130 = tpu.matmul %128, %129, %cst_69 {dimension_numbers = #tpu.dot_dimension_numbers<[1], [0], [0], [1], [0, 0, 1, 1], [], []>} : vector<2x128xbf16>, vector<128x384xbf16>, vector<2x384xf32> -> vector<2x384xf32>
    %131 = vector.broadcast %5 : vector<1x384xf32> to vector<2x384xf32>
    %132 = arith.addf %130, %131 : vector<2x384xf32>
    %133 = vector.extract_strided_slice %132 {offsets = [0, 0], sizes = [2, 128], strides = [1, 1]} : vector<2x384xf32> to vector<2x128xf32>
    %134 = arith.negf %133 : vector<2x128xf32>
    %135 = math.exp %134 : vector<2x128xf32>
    %cst_70 = arith.constant 1.000000e+00 : f32
    %136 = vector.broadcast %cst_70 : f32 to vector<2x128xf32>
    %137 = arith.addf %136, %135 : vector<2x128xf32>
    %138 = arith.divf %136, %137 : vector<2x128xf32>
    %139 = vector.extract_strided_slice %132 {offsets = [0, 128], sizes = [2, 128], strides = [1, 1]} : vector<2x384xf32> to vector<2x128xf32>
    %140 = arith.negf %139 : vector<2x128xf32>
    %141 = math.exp %140 : vector<2x128xf32>
    %cst_71 = arith.constant 1.000000e+00 : f32
    %142 = vector.broadcast %cst_71 : f32 to vector<2x128xf32>
    %143 = arith.addf %142, %141 : vector<2x128xf32>
    %144 = arith.divf %142, %143 : vector<2x128xf32>
    %145 = vector.extract_strided_slice %132 {offsets = [0, 256], sizes = [2, 128], strides = [1, 1]} : vector<2x384xf32> to vector<2x128xf32>
    %146 = vector.broadcast %6 : vector<1x128xf32> to vector<2x128xf32>
    %147 = arith.mulf %138, %146 : vector<2x128xf32>
    %148 = arith.addf %145, %147 : vector<2x128xf32>
    %149 = math.tanh %148 : vector<2x128xf32>
    %cst_72 = arith.constant 1.000000e+00 : f32
    %150 = vector.broadcast %cst_72 : f32 to vector<2x128xf32>
    %151 = arith.subf %150, %144 : vector<2x128xf32>
    %152 = arith.mulf %151, %149 : vector<2x128xf32>
    %153 = arith.truncf %152 : vector<2x128xf32> to vector<2x128xbf16>
    %c0_73 = arith.constant 0 : index
    %c0_74 = arith.constant 0 : index
    %154 = vector.load %arg7[%c0_73, %c0_74] : memref<128x64xbf16, #tpu.memory_space<vmem>>, vector<128x64xbf16>
    %cst_75 = arith.constant dense<0.000000e+00> : vector<2x64xf32>
    %155 = tpu.matmul %153, %154, %cst_75 {dimension_numbers = #tpu.dot_dimension_numbers<[1], [0], [0], [1], [0, 0, 1, 1], [], []>} : vector<2x128xbf16>, vector<128x64xbf16>, vector<2x64xf32> -> vector<2x64xf32>
    %156 = vector.broadcast %7 : vector<1x64xf32> to vector<2x64xf32>
    %157 = arith.addf %155, %156 : vector<2x64xf32>
    %cst_76 = arith.constant 0.000000e+00 : f32
    %158 = vector.broadcast %cst_76 : f32 to vector<2x64xf32>
    %159 = arith.maximumf %157, %158 : vector<2x64xf32>
    %160 = arith.truncf %159 : vector<2x64xf32> to vector<2x64xbf16>
    %c0_77 = arith.constant 0 : index
    %c0_78 = arith.constant 0 : index
    %161 = vector.load %arg8[%c0_77, %c0_78] : memref<64x128xbf16, #tpu.memory_space<vmem>>, vector<64x128xbf16>
    %cst_79 = arith.constant dense<0.000000e+00> : vector<2x128xf32>
    %162 = tpu.matmul %160, %161, %cst_79 {dimension_numbers = #tpu.dot_dimension_numbers<[1], [0], [0], [1], [0, 0, 1, 1], [], []>} : vector<2x64xbf16>, vector<64x128xbf16>, vector<2x128xf32> -> vector<2x128xf32>
    %163 = vector.broadcast %8 : vector<1x128xf32> to vector<2x128xf32>
    %164 = arith.addf %162, %163 : vector<2x128xf32>
    %c0_80 = arith.constant 0 : index
    %c0_81 = arith.constant 0 : index
    %165 = vector.load %arg10[%c0_80, %c0_81] : memref<2x128xf32, #tpu.memory_space<vmem>>, vector<2x128xf32>
    tpu.vector_store %arg10[%c0_80, %c0_81], %164 {strides = array<i32>} : memref<2x128xf32, #tpu.memory_space<vmem>>, vector<2x128xf32>,
    return
  }
  func.func @transform_0(%arg0: i32) -> (i32, i32, i32) {
    %c0_i32 = arith.constant 0 : i32
    %c0_i32_0 = arith.constant 0 : i32
    %c0_i32_1 = arith.constant 0 : i32
    return %arg0, %c0_i32, %c0_i32_0 : i32, i32, i32
  }
  func.func @transform_1(%arg0: i32) -> (i32, i32) {
    %c0_i32 = arith.constant 0 : i32
    %c0_i32_0 = arith.constant 0 : i32
    %c0_i32_1 = arith.constant 0 : i32
    return %c0_i32, %c0_i32_0 : i32, i32
  }
  func.func @transform_2(%arg0: i32) -> (i32, i32, i32) {
    %c0_i32 = arith.constant 0 : i32
    %c0_i32_0 = arith.constant 0 : i32
    %c0_i32_1 = arith.constant 0 : i32
    %c0_i32_2 = arith.constant 0 : i32
    return %c0_i32, %c0_i32_0, %c0_i32_1 : i32, i32, i32
  }
  func.func @transform_3(%arg0: i32) -> (i32, i32, i32) {
    %c0_i32 = arith.constant 0 : i32
    %c0_i32_0 = arith.constant 0 : i32
    %c0_i32_1 = arith.constant 0 : i32
    %c0_i32_2 = arith.constant 0 : i32
    return %c0_i32, %c0_i32_0, %c0_i32_1 : i32, i32, i32
  }
  func.func @transform_4(%arg0: i32) -> (i32, i32) {
    %c0_i32 = arith.constant 0 : i32
    %c0_i32_0 = arith.constant 0 : i32
    %c0_i32_1 = arith.constant 0 : i32
    return %c0_i32, %c0_i32_0 : i32, i32
  }
  func.func @transform_5(%arg0: i32) -> (i32, i32) {
    %c0_i32 = arith.constant 0 : i32
    %c0_i32_0 = arith.constant 0 : i32
    %c0_i32_1 = arith.constant 0 : i32
    return %c0_i32, %c0_i32_0 : i32, i32
  }
  func.func @transform_6(%arg0: i32) -> (i32, i32) {
    %c0_i32 = arith.constant 0 : i32
    %c0_i32_0 = arith.constant 0 : i32
    %c0_i32_1 = arith.constant 0 : i32
    return %c0_i32, %c0_i32_0 : i32, i32
  }
  func.func @transform_7(%arg0: i32) -> (i32, i32) {
    %c0_i32 = arith.constant 0 : i32
    %c0_i32_0 = arith.constant 0 : i32
    %c0_i32_1 = arith.constant 0 : i32
    return %c0_i32, %c0_i32_0 : i32, i32
  }
  func.func @transform_8(%arg0: i32) -> (i32, i32) {
    %c0_i32 = arith.constant 0 : i32
    %c0_i32_0 = arith.constant 0 : i32
    %c0_i32_1 = arith.constant 0 : i32
    return %c0_i32, %c0_i32_0 : i32, i32
  }
  func.func @transform_9(%arg0: i32) -> (i32, i32) {
    %c0_i32 = arith.constant 0 : i32
    %c0_i32_0 = arith.constant 0 : i32
    return %arg0, %c0_i32 : i32, i32
  }
}

</mosaic_0001>

<llo_original>
// kernel: tpu_custom_call.1
$region0: #{tpu_custom_call.1}
  #allocation0 [shape = 'u32[]', space=smem, size = 0x4, offset = 0x4, fixed_abs, tag = 'smem constant byte address 0x4 - core index']
  #allocation1 [shape = 'u32[144,128]{1,0:T(1,128)}', space=vmem, size = 0x12000, scoped, tag = 'internal scratch']
  %s0 = inlined_call_operand.hbm [shape: f32[2,16,16], index: 0, kind: input, shape index: {}]
  %s1 = inlined_call_operand.vmem [shape: bf16[16,32], index: 1, kind: input, shape index: {}]
  %s2 = inlined_call_operand.vmem [shape: bf16[5,32,32], index: 2, kind: input, shape index: {}]
  %s3 = inlined_call_operand.hbm [shape: bf16[3,32,64], index: 3, kind: input, shape index: {}]
  %s4 = inlined_call_operand.hbm [shape: bf16[64,128], index: 4, kind: input, shape index: {}]
  %s5 = inlined_call_operand.hbm [shape: bf16[128,384], index: 5, kind: input, shape index: {}]
  %s6 = inlined_call_operand.vmem [shape: bf16[128,64], index: 6, kind: input, shape index: {}]
  %s7 = inlined_call_operand.hbm [shape: bf16[64,128], index: 7, kind: input, shape index: {}]
  %s8 = inlined_call_operand.hbm [shape: f32[12,384], index: 8, kind: input, shape index: {}]
  %s9 = inlined_call_operand.hbm [shape: f32[2,128], index: 9, kind: output, shape index: {}]
  %s10 = sld [smem:[#allocation0]]
  $region70: #{tpu_custom_call.1} parent=0
    _
  %s12 = ssub.s32 1, %s10
  %s13 = scalar_select 0, %s12, %s10
  $region1: #{tpu_custom_call.1} parent=0
    #allocation2 [shape = 'u8[16384]{0}', space=vmem, size = 0x4000, scoped, tag = 'input window, operand 0, single buffered']
    #allocation3 [shape = 's32[1]{0}', space=sflag, size = 0x4, scoped, tag = 'scoped memory for tpu_custom_call.1']
    #allocation4 [shape = 's32[1]{0}', space=sflag, size = 0x4, scoped, tag = 'scoped memory for tpu_custom_call.1']
    #allocation5 [shape = 'u8[24576]{0}', space=vmem, size = 0x6000, scoped, tag = 'input window, operand 3, single buffered']
    #allocation6 [shape = 's32[1]{0}', space=sflag, size = 0x4, scoped, tag = 'scoped memory for tpu_custom_call.1']
    #allocation7 [shape = 'u8[16384]{0}', space=vmem, size = 0x4000, scoped, tag = 'input window, operand 4, single buffered']
    #allocation8 [shape = 'u8[98304]{0}', space=vmem, size = 0x18000, scoped, tag = 'input window, operand 5, single buffered']
    #allocation9 [shape = 's32[1]{0}', space=sflag, size = 0x4, scoped, tag = 'scoped memory for tpu_custom_call.1']
    #allocation10 [shape = 'u8[16384]{0}', space=vmem, size = 0x4000, scoped, tag = 'input window, operand 7, single buffered']
    #allocation11 [shape = 'u8[24576]{0}', space=vmem, size = 0x6000, scoped, tag = 'input window, operand 8, single buffered']
    #allocation12 [shape = 's32[1]{0}', space=sflag, size = 0x4, scoped, tag = 'scoped memory for tpu_custom_call.1']
    #allocation13 [shape = 'u8[1024]{0}', space=vmem, size = 0x400, scoped, tag = 'output window, operand 0, single buffered']
    %14 = vsyncpa [#allocation3], 0
    %15 = vsyncpa [#allocation6], 0
    %16 = vsyncpa [#allocation9], 0
    %17 = vsyncpa [#allocation12], 0
    %18 = vsyncpa [#allocation4], 0
    // Predicated region
    $region2: #{tpu_custom_call.1} parent=1 // pred_check
      _
    $region3: #{tpu_custom_call.1} parent=1 // pred_check_branch
      %20 = sbr.rel (0) target = $region5
    $region4: #{tpu_custom_call.1} parent=1 // pred_region
      %s22 = ssub.s32 512, 512
      %23 = vsyncadd [#allocation3], %s22
      %s24 = sshll.u32 [#allocation2], 4
      %s25 = int_to_ptr.vmem [resolvable:$true] %s24
      %30 = dma.hbm_to_vmem [thread:$0]  %s0, 512, %s25, [#allocation3], 128, 128, 8
    $region5: #{tpu_custom_call.1} parent=1 // pred_fallthru
      _
    // Predicated region
    $region6: #{tpu_custom_call.1} parent=1 // pred_check
      _
    $region7: #{tpu_custom_call.1} parent=1 // pred_check_branch
      %32 = sbr.rel (0) target = $region9
    $region8: #{tpu_custom_call.1} parent=1 // pred_region
      _
    $region9: #{tpu_custom_call.1} parent=1 // pred_fallthru
      _
    // Predicated region
    $region10: #{tpu_custom_call.1} parent=1 // pred_check
      _
    $region11: #{tpu_custom_call.1} parent=1 // pred_check_branch
      %34 = sbr.rel (0) target = $region13
    $region12: #{tpu_custom_call.1} parent=1 // pred_region
      _
    $region13: #{tpu_custom_call.1} parent=1 // pred_fallthru
      _
    // Predicated region
    $region14: #{tpu_custom_call.1} parent=1 // pred_check
      _
    $region15: #{tpu_custom_call.1} parent=1 // pred_check_branch
      %36 = sbr.rel (0) target = $region17
    $region16: #{tpu_custom_call.1} parent=1 // pred_region
      %s38 = ssub.s32 768, 768
      %39 = vsyncadd [#allocation6], %s38
      %s40 = sshll.u32 [#allocation5], 4
      %s41 = int_to_ptr.vmem [resolvable:$true] %s40
      %46 = dma.hbm_to_vmem [thread:$0]  %s3, 768, %s41, [#allocation6], 64, 64, 4
    $region17: #{tpu_custom_call.1} parent=1 // pred_fallthru
      _
    // Predicated region
    $region18: #{tpu_custom_call.1} parent=1 // pred_check
      _
    $region19: #{tpu_custom_call.1} parent=1 // pred_check_branch
      %48 = sbr.rel (0) target = $region21
    $region20: #{tpu_custom_call.1} parent=1 // pred_region
      %s50 = ssub.s32 512, 512
      %51 = vsyncadd [#allocation6], %s50
      %s52 = sshll.u32 [#allocation7], 4
      %s53 = int_to_ptr.vmem [resolvable:$true] %s52
      %58 = dma.hbm_to_vmem [thread:$0]  %s4, 512, %s53, [#allocation6], 64, 64, 4
    $region21: #{tpu_custom_call.1} parent=1 // pred_fallthru
      _
    // Predicated region
    $region22: #{tpu_custom_call.1} parent=1 // pred_check
      _
    $region23: #{tpu_custom_call.1} parent=1 // pred_check_branch
      %60 = sbr.rel (0) target = $region25
    $region24: #{tpu_custom_call.1} parent=1 // pred_region
      %s62 = ssub.s32 3072, 3072
      %63 = vsyncadd [#allocation9], %s62
      %s64 = sshll.u32 [#allocation8], 4
      %s65 = int_to_ptr.vmem [resolvable:$true] %s64
      %70 = dma.hbm_to_vmem [thread:$0]  %s5, 3072, %s65, [#allocation9], 192, 192, 12
    $region25: #{tpu_custom_call.1} parent=1 // pred_fallthru
      _
    // Predicated region
    $region26: #{tpu_custom_call.1} parent=1 // pred_check
      _
    $region27: #{tpu_custom_call.1} parent=1 // pred_check_branch
      %72 = sbr.rel (0) target = $region29
    $region28: #{tpu_custom_call.1} parent=1 // pred_region
      _
    $region29: #{tpu_custom_call.1} parent=1 // pred_fallthru
      _
    // Predicated region
    $region30: #{tpu_custom_call.1} parent=1 // pred_check
      _
    $region31: #{tpu_custom_call.1} parent=1 // pred_check_branch
      %74 = sbr.rel (0) target = $region33
    $region32: #{tpu_custom_call.1} parent=1 // pred_region
      %s76 = ssub.s32 512, 512
      %77 = vsyncadd [#allocation9], %s76
      %s78 = sshll.u32 [#allocation10], 4
      %s79 = int_to_ptr.vmem [resolvable:$true] %s78
      %84 = dma.hbm_to_vmem [thread:$0]  %s7, 512, %s79, [#allocation9], 64, 64, 4
    $region33: #{tpu_custom_call.1} parent=1 // pred_fallthru
      _
    // Predicated region
    $region34: #{tpu_custom_call.1} parent=1 // pred_check
      _
    $region35: #{tpu_custom_call.1} parent=1 // pred_check_branch
      %86 = sbr.rel (0) target = $region37
    $region36: #{tpu_custom_call.1} parent=1 // pred_region
      %s88 = ssub.s32 768, 768
      %89 = vsyncadd [#allocation12], %s88
      %s90 = sshll.u32 [#allocation11], 4
      %s91 = int_to_ptr.vmem [resolvable:$true] %s90
      %96 = dma.hbm_to_vmem [thread:$0]  %s8, 768, %s91, [#allocation12], 384, 384, 24
    $region37: #{tpu_custom_call.1} parent=1 // pred_fallthru
      _
    // Predicated region
    $region38: #{tpu_custom_call.1} parent=1 // pred_check
      _
    $region39: #{tpu_custom_call.1} parent=1 // pred_check_branch
      %98 = sbr.rel (0) target = $region41
    $region40: #{tpu_custom_call.1} parent=1 // pred_region
      %99 = dma.done [#allocation3], 512
    $region41: #{tpu_custom_call.1} parent=1 // pred_fallthru
      _
    // Predicated region
    $region42: #{tpu_custom_call.1} parent=1 // pred_check
      _
    $region43: #{tpu_custom_call.1} parent=1 // pred_check_branch
      %101 = sbr.rel (0) target = $region45
    $region44: #{tpu_custom_call.1} parent=1 // pred_region
      %102 = dma.done [#allocation6], 768
    $region45: #{tpu_custom_call.1} parent=1 // pred_fallthru
      _
    // Predicated region
    $region46: #{tpu_custom_call.1} parent=1 // pred_check
      _
    $region47: #{tpu_custom_call.1} parent=1 // pred_check_branch
      %104 = sbr.rel (0) target = $region49
    $region48: #{tpu_custom_call.1} parent=1 // pred_region
      %105 = dma.done [#allocation6], 512
    $region49: #{tpu_custom_call.1} parent=1 // pred_fallthru
      _
    // Predicated region
    $region50: #{tpu_custom_call.1} parent=1 // pred_check
      _
    $region51: #{tpu_custom_call.1} parent=1 // pred_check_branch
      %107 = sbr.rel (0) target = $region53
    $region52: #{tpu_custom_call.1} parent=1 // pred_region
      %108 = dma.done [#allocation9], 3072
    $region53: #{tpu_custom_call.1} parent=1 // pred_fallthru
      _
    // Predicated region
    $region54: #{tpu_custom_call.1} parent=1 // pred_check
      _
    $region55: #{tpu_custom_call.1} parent=1 // pred_check_branch
      %110 = sbr.rel (0) target = $region57
    $region56: #{tpu_custom_call.1} parent=1 // pred_region
      %111 = dma.done [#allocation9], 512
    $region57: #{tpu_custom_call.1} parent=1 // pred_fallthru
      _
    // Predicated region
    $region58: #{tpu_custom_call.1} parent=1 // pred_check
      _
    $region59: #{tpu_custom_call.1} parent=1 // pred_check_branch
      %113 = sbr.rel (0) target = $region61
    $region60: #{tpu_custom_call.1} parent=1 // pred_region
      %114 = dma.done [#allocation12], 768
    $region61: #{tpu_custom_call.1} parent=1 // pred_fallthru
      _
    %v116 = vld [vmem:[#allocation11] ss:$0 sm:$0xff]
    %v117 = vld [vmem:[#allocation11 + $0x1] ss:$0 sm:$0xff]
    %v118 = vld [vmem:[#allocation11 + $0x2] ss:$0 sm:$0xff]
    %v119 = vld [vmem:[#allocation11 + $0x3] ss:$0 sm:$0xff]
    %v120 = vld [vmem:[#allocation11 + $0x4] ss:$0 sm:$0xff]
    %s121 = scalar_lea.vmem [#allocation11], 5
    %v122 = vld [vmem:[%s121] ss:$8 sm:$0x7]
    %v123 = vld [vmem:[#allocation11 + $0x6] ss:$0 sm:$0xff]
    %v124 = vld [vmem:[#allocation11 + $0x7] ss:$0 sm:$0xff]
    %v125 = vld [vmem:[#allocation11 + $0x18] ss:$0 sm:$0xff]
    %v126 = vld [vmem:[#allocation11 + $0x19] ss:$0 sm:$0xff]
    %v127 = vld [vmem:[#allocation11 + $0x1a] ss:$0 sm:$0xff]
    %v128 = vld [vmem:[#allocation11 + $0x1b] ss:$0 sm:$0xff]
    %v129 = vld [vmem:[#allocation2] sm:$0xff]
    %v130 = vld [vmem:[#allocation2 + $0x8] sm:$0xff]
    %v131 = vld [vmem:[#allocation2 + $0x10] sm:$0xff]
    %v132 = vld [vmem:[#allocation2 + $0x18] sm:$0xff]
    %v133 = vpack.c.bf16 %v130, %v129
    %v134 = vpack.c.bf16 %v132, %v131
    %v135 = vld [vmem:[%s1] sm:$0xf]
    %v136 = vld [vmem:[%s1 + $0x4] sm:$0xf]
    %v139 = vunpack.c.l.b16 %v135
    %v140 = vunpack.c.l.b16 %v136
    %v141 = vpack.c.b16 %v140, %v139
    %vm143 = vcmask 130048
    %v145 = vsel %vm143, %v133, 0
    %v148 = vsel %vm143, %v134, 0
    %150 = vmatprep.subr.bf16.mxu0 0
    %151 = vmatpush1.bf16.msra.mxu0 0
    %152 = vmatprep.subr.bf16.mxu0 0
    %153 = vmatpush1.bf16.msra.mxu0 0
    %154 = vmatprep.subr.bf16.mxu0 0
    %155 = vmatpush1.bf16.msra.mxu0 0
    %156 = vmatprep.subr.bf16.mxu0 0
    %157 = vmatpush1.bf16.msra.mxu0 0
    %158 = vmatprep.subr.bf16.mxu0 0
    %159 = vmatpush1.bf16.msra.mxu0 0
    %160 = vmatprep.subr.bf16.mxu0 0
    %161 = vmatpush1.bf16.msra.mxu0 0
    %162 = vmatprep.subr.bf16.mxu0 0
    %163 = vmatpush1.bf16.msra.mxu0 0
    %164 = vmatprep.subr.bf16.mxu0 0
    %165 = vmatpush1.bf16.msra.mxu0 %v141
    %166 = vmatprep.subr.bf16.mxu0 0
    %167 = vmatpush2.bf16.msra.mxu0 0
    %168 = vmatprep.subr.bf16.mxu0 0
    %169 = vmatpush2.bf16.msra.mxu0 0
    %170 = vmatprep.subr.bf16.mxu0 0
    %171 = vmatpush2.bf16.msra.mxu0 0
    %172 = vmatprep.subr.bf16.mxu0 0
    %173 = vmatpush2.bf16.msra.mxu0 0
    %174 = vmatprep.subr.bf16.mxu0 0
    %175 = vmatpush2.bf16.msra.mxu0 0
    %176 = vmatprep.subr.bf16.mxu0 0
    %177 = vmatpush2.bf16.msra.mxu0 0
    %178 = vmatprep.subr.bf16.mxu0 0
    %179 = vmatpush2.bf16.msra.mxu0 0
    %180 = vmatprep.subr.bf16.mxu0 0
    %181 = vmatpush2.bf16.msra.mxu0 0
    %182 = vmatprep.mubr.bf16.mxu0 0
    %183 = vmatmul.mubr.bf16.gmra.mxu0 %v145
    %v184 = vpop.f32.mrf.mxu0
    %v185 = vadd.f32 %v116, %v184
    %v186 = vpop.f32.mrf.mxu0
    %v187 = vpop.f32.mrf.mxu0
    %v188 = vadd.f32 %v116, %v187
    %v189 = vpop.f32.mrf.mxu0
    %190 = vmatprep.mubr.bf16.mxu0 0
    %191 = vmatmul.mubr.bf16.gmra.mxu0 %v148
    %v192 = vpop.f32.mrf.mxu0
    %v193 = vadd.f32 %v116, %v192
    %v194 = vpop.f32.mrf.mxu0
    %v195 = vpop.f32.mrf.mxu0
    %v196 = vadd.f32 %v116, %v195
    %v197 = vpop.f32.mrf.mxu0
    %198 = vdwg.mxu0
    %vm203 = vcmask 1041408
    %v204 = vrot.slane %v185, 6
    %v205 = vrot.slane %v188, 6
    %v206 = vsel %vm203, %v204, %v205
    %v207 = vrot.slane %v193, 6
    %v208 = vrot.slane %v196, 6
    %v209 = vsel %vm203, %v207, %v208
    %v214 = vsel %vm203, 0.0, %v204
    %v215 = vsel %vm203, 0.0, %v207
    %v216 = vpack.c.bf16 %v206, %v214
    %v217 = vpack.c.bf16 %v209, %v215
    %v218 = vld [vmem:[%s2] sm:$0xf]
    %v219 = vld [vmem:[%s2 + $0x4] sm:$0xf]
    %v220 = vld [vmem:[%s2 + $0x8] sm:$0xf]
    %v221 = vld [vmem:[%s2 + $0xc] sm:$0xf]
    %v226 = vunpack.c.l.b16 %v218
    %v227 = vunpack.c.l.b16 %v219
    %v228 = vunpack.c.l.b16 %v220
    %v229 = vunpack.c.l.b16 %v221
    %v230 = vpack.c.b16 %v227, %v226
    %v231 = vpack.c.b16 %v229, %v228
    %vm234 = vcmask 261120
    %v236 = vsel %vm234, %v216, 0
    %v239 = vsel %vm234, %v217, 0
    %241 = vmatprep.subr.bf16.mxu0 0
    %242 = vmatpush1.bf16.msra.mxu0 0
    %243 = vmatprep.subr.bf16.mxu0 0
    %244 = vmatpush1.bf16.msra.mxu0 0
    %245 = vmatprep.subr.bf16.mxu0 0
    %246 = vmatpush1.bf16.msra.mxu0 0
    %247 = vmatprep.subr.bf16.mxu0 0
    %248 = vmatpush1.bf16.msra.mxu0 0
    %249 = vmatprep.subr.bf16.mxu0 0
    %250 = vmatpush1.bf16.msra.mxu0 0
    %251 = vmatprep.subr.bf16.mxu0 0
    %252 = vmatpush1.bf16.msra.mxu0 0
    %253 = vmatprep.subr.bf16.mxu0 0
    %254 = vmatpush1.bf16.msra.mxu0 %v231
    %255 = vmatprep.subr.bf16.mxu0 0
    %256 = vmatpush1.bf16.msra.mxu0 %v230
    %257 = vmatprep.subr.bf16.mxu0 0
    %258 = vmatpush2.bf16.msra.mxu0 0
    %259 = vmatprep.subr.bf16.mxu0 0
    %260 = vmatpush2.bf16.msra.mxu0 0
    %261 = vmatprep.subr.bf16.mxu0 0
    %262 = vmatpush2.bf16.msra.mxu0 0
    %263 = vmatprep.subr.bf16.mxu0 0
    %264 = vmatpush2.bf16.msra.mxu0 0
    %265 = vmatprep.subr.bf16.mxu0 0
    %266 = vmatpush2.bf16.msra.mxu0 0
    %267 = vmatprep.subr.bf16.mxu0 0
    %268 = vmatpush2.bf16.msra.mxu0 0
    %269 = vmatprep.subr.bf16.mxu0 0
    %270 = vmatpush2.bf16.msra.mxu0 0
    %271 = vmatprep.subr.bf16.mxu0 0
    %272 = vmatpush2.bf16.msra.mxu0 0
    %273 = vmatprep.mubr.bf16.mxu0 0
    %274 = vmatmul.mubr.bf16.gmra.mxu0 %v236
    %v275 = vpop.f32.mrf.mxu0
    %v276 = vadd.f32 0.0, %v275
    %v277 = vpop.f32.mrf.mxu0
    %v278 = vpop.f32.mrf.mxu0
    %v279 = vadd.f32 0.0, %v278
    %v280 = vpop.f32.mrf.mxu0
    %281 = vmatprep.mubr.bf16.mxu0 0
    %282 = vmatmul.mubr.bf16.gmra.mxu0 %v239
    %v283 = vpop.f32.mrf.mxu0
    %v284 = vadd.f32 0.0, %v283
    %v285 = vpop.f32.mrf.mxu0
    %v286 = vpop.f32.mrf.mxu0
    %v287 = vadd.f32 0.0, %v286
    %v288 = vpop.f32.mrf.mxu0
    %289 = vdwg.mxu0
    %v290 = vadd.f32 %v117, %v276
    %v291 = vadd.f32 %v117, %v279
    %v292 = vadd.f32 %v117, %v284
    %v293 = vadd.f32 %v117, %v287
    %vm294 = vcmask 1040384
    %v295 = vrot.slane %v185, 7
    %v296 = vrot.slane %v188, 7
    %v297 = vsel %vm294, %v295, %v296
    %v298 = vrot.slane %v193, 7
    %v299 = vrot.slane %v196, 7
    %v300 = vsel %vm294, %v298, %v299
    %v305 = vsel %vm294, 0.0, %v295
    %v306 = vsel %vm294, 0.0, %v298
    %v307 = vpack.c.bf16 %v297, %v305
    %v308 = vpack.c.bf16 %v300, %v306
    %s309 = scalar_lea.vmem %s2, 16
    %v310 = vld [vmem:[%s309] sm:$0xf]
    %v311 = vld [vmem:[%s309 + $0x4] sm:$0xf]
    %v312 = vld [vmem:[%s309 + $0x8] sm:$0xf]
    %v313 = vld [vmem:[%s309 + $0xc] sm:$0xf]
    %v318 = vunpack.c.l.b16 %v310
    %v319 = vunpack.c.l.b16 %v311
    %v320 = vunpack.c.l.b16 %v312
    %v321 = vunpack.c.l.b16 %v313
    %v322 = vpack.c.b16 %v319, %v318
    %v323 = vpack.c.b16 %v321, %v320
    %v327 = vsel %vm234, %v307, 0
    %v330 = vsel %vm234, %v308, 0
    %332 = vmatprep.subr.bf16.mxu0 0
    %333 = vmatpush1.bf16.msra.mxu0 0
    %334 = vmatprep.subr.bf16.mxu0 0
    %335 = vmatpush1.bf16.msra.mxu0 0
    %336 = vmatprep.subr.bf16.mxu0 0
    %337 = vmatpush1.bf16.msra.mxu0 0
    %338 = vmatprep.subr.bf16.mxu0 0
    %339 = vmatpush1.bf16.msra.mxu0 0
    %340 = vmatprep.subr.bf16.mxu0 0
    %341 = vmatpush1.bf16.msra.mxu0 0
    %342 = vmatprep.subr.bf16.mxu0 0
    %343 = vmatpush1.bf16.msra.mxu0 0
    %344 = vmatprep.subr.bf16.mxu0 0
    %345 = vmatpush1.bf16.msra.mxu0 %v323
    %346 = vmatprep.subr.bf16.mxu0 0
    %347 = vmatpush1.bf16.msra.mxu0 %v322
    %348 = vmatprep.subr.bf16.mxu0 0
    %349 = vmatpush2.bf16.msra.mxu0 0
    %350 = vmatprep.subr.bf16.mxu0 0
    %351 = vmatpush2.bf16.msra.mxu0 0
    %352 = vmatprep.subr.bf16.mxu0 0
    %353 = vmatpush2.bf16.msra.mxu0 0
    %354 = vmatprep.subr.bf16.mxu0 0
    %355 = vmatpush2.bf16.msra.mxu0 0
    %356 = vmatprep.subr.bf16.mxu0 0
    %357 = vmatpush2.bf16.msra.mxu0 0
    %358 = vmatprep.subr.bf16.mxu0 0
    %359 = vmatpush2.bf16.msra.mxu0 0
    %360 = vmatprep.subr.bf16.mxu0 0
    %361 = vmatpush2.bf16.msra.mxu0 0
    %362 = vmatprep.subr.bf16.mxu0 0
    %363 = vmatpush2.bf16.msra.mxu0 0
    %364 = vmatprep.mubr.bf16.mxu0 0
    %365 = vmatmul.mubr.bf16.gmra.mxu0 %v327
    %v366 = vpop.f32.mrf.mxu0
    %v367 = vadd.f32 0.0, %v366
    %v368 = vpop.f32.mrf.mxu0
    %v369 = vpop.f32.mrf.mxu0
    %v370 = vadd.f32 0.0, %v369
    %v371 = vpop.f32.mrf.mxu0
    %372 = vmatprep.mubr.bf16.mxu0 0
    %373 = vmatmul.mubr.bf16.gmra.mxu0 %v330
    %v374 = vpop.f32.mrf.mxu0
    %v375 = vadd.f32 0.0, %v374
    %v376 = vpop.f32.mrf.mxu0
    %v377 = vpop.f32.mrf.mxu0
    %v378 = vadd.f32 0.0, %v377
    %v379 = vpop.f32.mrf.mxu0
    %380 = vdwg.mxu0
    %v381 = vadd.f32 %v290, %v367
    %v382 = vadd.f32 %v291, %v370
    %v383 = vadd.f32 %v292, %v375
    %v384 = vadd.f32 %v293, %v378
    %v385 = vpack.c.bf16 %v188, %v185
    %v386 = vpack.c.bf16 %v196, %v193
    %s387 = scalar_lea.vmem %s2, 32
    %v388 = vld [vmem:[%s387] sm:$0xf]
    %v389 = vld [vmem:[%s387 + $0x4] sm:$0xf]
    %v390 = vld [vmem:[%s387 + $0x8] sm:$0xf]
    %v391 = vld [vmem:[%s387 + $0xc] sm:$0xf]
    %v396 = vunpack.c.l.b16 %v388
    %v397 = vunpack.c.l.b16 %v389
    %v398 = vunpack.c.l.b16 %v390
    %v399 = vunpack.c.l.b16 %v391
    %v400 = vpack.c.b16 %v397, %v396
    %v401 = vpack.c.b16 %v399, %v398
    %v405 = vsel %vm234, %v385, 0
    %v408 = vsel %vm234, %v386, 0
    %410 = vmatprep.subr.bf16.mxu0 0
    %411 = vmatpush1.bf16.msra.mxu0 0
    %412 = vmatprep.subr.bf16.mxu0 0
    %413 = vmatpush1.bf16.msra.mxu0 0
    %414 = vmatprep.subr.bf16.mxu0 0
    %415 = vmatpush1.bf16.msra.mxu0 0
    %416 = vmatprep.subr.bf16.mxu0 0
    %417 = vmatpush1.bf16.msra.mxu0 0
    %418 = vmatprep.subr.bf16.mxu0 0
    %419 = vmatpush1.bf16.msra.mxu0 0
    %420 = vmatprep.subr.bf16.mxu0 0
    %421 = vmatpush1.bf16.msra.mxu0 0
    %422 = vmatprep.subr.bf16.mxu0 0
    %423 = vmatpush1.bf16.msra.mxu0 %v401
    %424 = vmatprep.subr.bf16.mxu0 0
    %425 = vmatpush1.bf16.msra.mxu0 %v400
    %426 = vmatprep.subr.bf16.mxu0 0
    %427 = vmatpush2.bf16.msra.mxu0 0
    %428 = vmatprep.subr.bf16.mxu0 0
    %429 = vmatpush2.bf16.msra.mxu0 0
    %430 = vmatprep.subr.bf16.mxu0 0
    %431 = vmatpush2.bf16.msra.mxu0 0
    %432 = vmatprep.subr.bf16.mxu0 0
    %433 = vmatpush2.bf16.msra.mxu0 0
    %434 = vmatprep.subr.bf16.mxu0 0
    %435 = vmatpush2.bf16.msra.mxu0 0
    %436 = vmatprep.subr.bf16.mxu0 0
    %437 = vmatpush2.bf16.msra.mxu0 0
    %438 = vmatprep.subr.bf16.mxu0 0
    %439 = vmatpush2.bf16.msra.mxu0 0
    %440 = vmatprep.subr.bf16.mxu0 0
    %441 = vmatpush2.bf16.msra.mxu0 0
    %442 = vmatprep.mubr.bf16.mxu0 0
    %443 = vmatmul.mubr.bf16.gmra.mxu0 %v405
    %v444 = vpop.f32.mrf.mxu0
    %v445 = vadd.f32 0.0, %v444
    %v446 = vpop.f32.mrf.mxu0
    %v447 = vpop.f32.mrf.mxu0
    %v448 = vadd.f32 0.0, %v447
    %v449 = vpop.f32.mrf.mxu0
    %450 = vmatprep.mubr.bf16.mxu0 0
    %451 = vmatmul.mubr.bf16.gmra.mxu0 %v408
    %v452 = vpop.f32.mrf.mxu0
    %v453 = vadd.f32 0.0, %v452
    %v454 = vpop.f32.mrf.mxu0
    %v455 = vpop.f32.mrf.mxu0
    %v456 = vadd.f32 0.0, %v455
    %v457 = vpop.f32.mrf.mxu0
    %458 = vdwg.mxu0
    %v459 = vadd.f32 %v381, %v445
    %v460 = vadd.f32 %v382, %v448
    %v461 = vadd.f32 %v383, %v453
    %v462 = vadd.f32 %v384, %v456
    %vm463 = vcmask 1046528
    %v464 = vrot.slane %v185, 1
    %v465 = vrot.slane %v188, 1
    %v466 = vsel %vm463, %v464, %v465
    %v467 = vrot.slane %v193, 1
    %v468 = vrot.slane %v196, 1
    %v469 = vsel %vm463, %v467, %v468
    %v474 = vsel %vm463, %v465, 0.0
    %v475 = vsel %vm463, %v468, 0.0
    %v476 = vpack.c.bf16 %v474, %v466
    %v477 = vpack.c.bf16 %v475, %v469
    %s478 = scalar_lea.vmem %s2, 48
    %v479 = vld [vmem:[%s478] sm:$0xf]
    %v480 = vld [vmem:[%s478 + $0x4] sm:$0xf]
    %v481 = vld [vmem:[%s478 + $0x8] sm:$0xf]
    %v482 = vld [vmem:[%s478 + $0xc] sm:$0xf]
    %v487 = vunpack.c.l.b16 %v479
    %v488 = vunpack.c.l.b16 %v480
    %v489 = vunpack.c.l.b16 %v481
    %v490 = vunpack.c.l.b16 %v482
    %v491 = vpack.c.b16 %v488, %v487
    %v492 = vpack.c.b16 %v490, %v489
    %v496 = vsel %vm234, %v476, 0
    %v499 = vsel %vm234, %v477, 0
    %501 = vmatprep.subr.bf16.mxu0 0
    %502 = vmatpush1.bf16.msra.mxu0 0
    %503 = vmatprep.subr.bf16.mxu0 0
    %504 = vmatpush1.bf16.msra.mxu0 0
    %505 = vmatprep.subr.bf16.mxu0 0
    %506 = vmatpush1.bf16.msra.mxu0 0
    %507 = vmatprep.subr.bf16.mxu0 0
    %508 = vmatpush1.bf16.msra.mxu0 0
    %509 = vmatprep.subr.bf16.mxu0 0
    %510 = vmatpush1.bf16.msra.mxu0 0
    %511 = vmatprep.subr.bf16.mxu0 0
    %512 = vmatpush1.bf16.msra.mxu0 0
    %513 = vmatprep.subr.bf16.mxu0 0
    %514 = vmatpush1.bf16.msra.mxu0 %v492
    %515 = vmatprep.subr.bf16.mxu0 0
    %516 = vmatpush1.bf16.msra.mxu0 %v491
    %517 = vmatprep.subr.bf16.mxu0 0
    %518 = vmatpush2.bf16.msra.mxu0 0
    %519 = vmatprep.subr.bf16.mxu0 0
    %520 = vmatpush2.bf16.msra.mxu0 0
    %521 = vmatprep.subr.bf16.mxu0 0
    %522 = vmatpush2.bf16.msra.mxu0 0
    %523 = vmatprep.subr.bf16.mxu0 0
    %524 = vmatpush2.bf16.msra.mxu0 0
    %525 = vmatprep.subr.bf16.mxu0 0
    %526 = vmatpush2.bf16.msra.mxu0 0
    %527 = vmatprep.subr.bf16.mxu0 0
    %528 = vmatpush2.bf16.msra.mxu0 0
    %529 = vmatprep.subr.bf16.mxu0 0
    %530 = vmatpush2.bf16.msra.mxu0 0
    %531 = vmatprep.subr.bf16.mxu0 0
    %532 = vmatpush2.bf16.msra.mxu0 0
    %533 = vmatprep.mubr.bf16.mxu0 0
    %534 = vmatmul.mubr.bf16.gmra.mxu0 %v496
    %v535 = vpop.f32.mrf.mxu0
    %v536 = vadd.f32 0.0, %v535
    %v537 = vpop.f32.mrf.mxu0
    %v538 = vpop.f32.mrf.mxu0
    %v539 = vadd.f32 0.0, %v538
    %v540 = vpop.f32.mrf.mxu0
    %541 = vmatprep.mubr.bf16.mxu0 0
    %542 = vmatmul.mubr.bf16.gmra.mxu0 %v499
    %v543 = vpop.f32.mrf.mxu0
    %v544 = vadd.f32 0.0, %v543
    %v545 = vpop.f32.mrf.mxu0
    %v546 = vpop.f32.mrf.mxu0
    %v547 = vadd.f32 0.0, %v546
    %v548 = vpop.f32.mrf.mxu0
    %549 = vdwg.mxu0
    %v550 = vadd.f32 %v459, %v536
    %v551 = vadd.f32 %v460, %v539
    %v552 = vadd.f32 %v461, %v544
    %v553 = vadd.f32 %v462, %v547
    %vm554 = vcmask 1045504
    %v555 = vrot.slane %v185, 2
    %v556 = vrot.slane %v188, 2
    %v557 = vsel %vm554, %v555, %v556
    %v558 = vrot.slane %v193, 2
    %v559 = vrot.slane %v196, 2
    %v560 = vsel %vm554, %v558, %v559
    %v565 = vsel %vm554, %v556, 0.0
    %v566 = vsel %vm554, %v559, 0.0
    %v567 = vpack.c.bf16 %v565, %v557
    %v568 = vpack.c.bf16 %v566, %v560
    %s569 = scalar_lea.vmem %s2, 64
    %v570 = vld [vmem:[%s569] sm:$0xf]
    %v571 = vld [vmem:[%s569 + $0x4] sm:$0xf]
    %v572 = vld [vmem:[%s569 + $0x8] sm:$0xf]
    %v573 = vld [vmem:[%s569 + $0xc] sm:$0xf]
    %v578 = vunpack.c.l.b16 %v570
    %v579 = vunpack.c.l.b16 %v571
    %v580 = vunpack.c.l.b16 %v572
    %v581 = vunpack.c.l.b16 %v573
    %v582 = vpack.c.b16 %v579, %v578
    %v583 = vpack.c.b16 %v581, %v580
    %v587 = vsel %vm234, %v567, 0
    %v590 = vsel %vm234, %v568, 0
    %592 = vmatprep.subr.bf16.mxu0 0
    %593 = vmatpush1.bf16.msra.mxu0 0
    %594 = vmatprep.subr.bf16.mxu0 0
    %595 = vmatpush1.bf16.msra.mxu0 0
    %596 = vmatprep.subr.bf16.mxu0 0
    %597 = vmatpush1.bf16.msra.mxu0 0
    %598 = vmatprep.subr.bf16.mxu0 0
    %599 = vmatpush1.bf16.msra.mxu0 0
    %600 = vmatprep.subr.bf16.mxu0 0
    %601 = vmatpush1.bf16.msra.mxu0 0
    %602 = vmatprep.subr.bf16.mxu0 0
    %603 = vmatpush1.bf16.msra.mxu0 0
    %604 = vmatprep.subr.bf16.mxu0 0
    %605 = vmatpush1.bf16.msra.mxu0 %v583
    %606 = vmatprep.subr.bf16.mxu0 0
    %607 = vmatpush1.bf16.msra.mxu0 %v582
    %608 = vmatprep.subr.bf16.mxu0 0
    %609 = vmatpush2.bf16.msra.mxu0 0
    %610 = vmatprep.subr.bf16.mxu0 0
    %611 = vmatpush2.bf16.msra.mxu0 0
    %612 = vmatprep.subr.bf16.mxu0 0
    %613 = vmatpush2.bf16.msra.mxu0 0
    %614 = vmatprep.subr.bf16.mxu0 0
    %615 = vmatpush2.bf16.msra.mxu0 0
    %616 = vmatprep.subr.bf16.mxu0 0
    %617 = vmatpush2.bf16.msra.mxu0 0
    %618 = vmatprep.subr.bf16.mxu0 0
    %619 = vmatpush2.bf16.msra.mxu0 0
    %620 = vmatprep.subr.bf16.mxu0 0
    %621 = vmatpush2.bf16.msra.mxu0 0
    %622 = vmatprep.subr.bf16.mxu0 0
    %623 = vmatpush2.bf16.msra.mxu0 0
    %624 = vmatprep.mubr.bf16.mxu0 0
    %625 = vmatmul.mubr.bf16.gmra.mxu0 %v587
    %v626 = vpop.f32.mrf.mxu0
    %v627 = vadd.f32 0.0, %v626
    %v628 = vpop.f32.mrf.mxu0
    %v629 = vpop.f32.mrf.mxu0
    %v630 = vadd.f32 0.0, %v629
    %v631 = vpop.f32.mrf.mxu0
    %632 = vmatprep.mubr.bf16.mxu0 0
    %633 = vmatmul.mubr.bf16.gmra.mxu0 %v590
    %v634 = vpop.f32.mrf.mxu0
    %v635 = vadd.f32 0.0, %v634
    %v636 = vpop.f32.mrf.mxu0
    %v637 = vpop.f32.mrf.mxu0
    %v638 = vadd.f32 0.0, %v637
    %v639 = vpop.f32.mrf.mxu0
    %640 = vdwg.mxu0
    %v641 = vadd.f32 %v550, %v627
    %v642 = vadd.f32 %v551, %v630
    %v643 = vadd.f32 %v552, %v635
    %v644 = vadd.f32 %v553, %v638
    %v645 = vmax.f32 %v641, 0.0
    %v646 = vmax.f32 %v642, 0.0
    %v647 = vmax.f32 %v643, 0.0
    %v648 = vmax.f32 %v644, 0.0
    %v653 = vcombine.high %v645, %v645
    %v655 = vunpack.c.l.s4 1983009808
    %v656 = vunpack.c.0.s8 %v655
    %v657 = vlaneseq
    %v658 = vshrl.u32 %v657, 7
    %v659 = vsub.s32 %v656, %v658
    %v660 = vrot.slane %v645, %v659
    %v662 = vunpack.c.l.s4 1983009808
    %v663 = vunpack.c.0.s8 %v662
    %v664 = vlaneseq
    %v665 = vshrl.u32 %v664, 7
    %v666 = vsub.s32 %v663, %v665
    %v667 = vrot.slane %v653, %v666
    %v668 = vcombine.high %v660, %v660
    %v669 = vcombine.high %v667, %v667
    %v670 = vcombine.high %v646, %v646
    %v672 = vunpack.c.l.s4 1983009808
    %v673 = vunpack.c.0.s8 %v672
    %v674 = vlaneseq
    %v675 = vshrl.u32 %v674, 7
    %v676 = vsub.s32 %v673, %v675
    %v677 = vrot.slane %v646, %v676
    %v679 = vunpack.c.l.s4 1983009808
    %v680 = vunpack.c.0.s8 %v679
    %v681 = vlaneseq
    %v682 = vshrl.u32 %v681, 7
    %v683 = vsub.s32 %v680, %v682
    %v684 = vrot.slane %v670, %v683
    %v685 = vcombine.high %v677, %v677
    %v686 = vcombine.high %v684, %v684
    %v687 = vcombine.high %v647, %v647
    %v689 = vunpack.c.l.s4 1983009808
    %v690 = vunpack.c.0.s8 %v689
    %v691 = vlaneseq
    %v692 = vshrl.u32 %v691, 7
    %v693 = vsub.s32 %v690, %v692
    %v694 = vrot.slane %v647, %v693
    %v696 = vunpack.c.l.s4 1983009808
    %v697 = vunpack.c.0.s8 %v696
    %v698 = vlaneseq
    %v699 = vshrl.u32 %v698, 7
    %v700 = vsub.s32 %v697, %v699
    %v701 = vrot.slane %v687, %v700
    %v702 = vcombine.high %v694, %v694
    %v703 = vcombine.high %v701, %v701
    %v704 = vcombine.high %v648, %v648
    %v706 = vunpack.c.l.s4 1983009808
    %v707 = vunpack.c.0.s8 %v706
    %v708 = vlaneseq
    %v709 = vshrl.u32 %v708, 7
    %v710 = vsub.s32 %v707, %v709
    %v711 = vrot.slane %v648, %v710
    %v713 = vunpack.c.l.s4 1983009808
    %v714 = vunpack.c.0.s8 %v713
    %v715 = vlaneseq
    %v716 = vshrl.u32 %v715, 7
    %v717 = vsub.s32 %v714, %v716
    %v718 = vrot.slane %v704, %v717
    %v719 = vcombine.high %v711, %v711
    %v720 = vcombine.high %v718, %v718
    %vm737 = vcmask 254976
    %v738 = vsel %vm737, %v660, -inf
    %v739 = vrot.slane %v738, 4
    %v740 = vmax.f32 %v738, %v739
    %v741 = vrot.slane %v740, 2
    %v742 = vmax.f32 %v740, %v741
    %v743 = vrot.slane %v742, 1
    %v744 = vmax.f32 %v742, %v743
    %v745 = vsel %vm737, %v668, -inf
    %v746 = vrot.slane %v745, 4
    %v747 = vmax.f32 %v745, %v746
    %v748 = vrot.slane %v747, 2
    %v749 = vmax.f32 %v747, %v748
    %v750 = vrot.slane %v749, 1
    %v751 = vmax.f32 %v749, %v750
    %v752 = vsel %vm737, %v667, -inf
    %v753 = vrot.slane %v752, 4
    %v754 = vmax.f32 %v752, %v753
    %v755 = vrot.slane %v754, 2
    %v756 = vmax.f32 %v754, %v755
    %v757 = vrot.slane %v756, 1
    %v758 = vmax.f32 %v756, %v757
    %v759 = vsel %vm737, %v669, -inf
    %v760 = vrot.slane %v759, 4
    %v761 = vmax.f32 %v759, %v760
    %v762 = vrot.slane %v761, 2
    %v763 = vmax.f32 %v761, %v762
    %v764 = vrot.slane %v763, 1
    %v765 = vmax.f32 %v763, %v764
    %v766 = vsel %vm737, %v677, -inf
    %v767 = vrot.slane %v766, 4
    %v768 = vmax.f32 %v766, %v767
    %v769 = vrot.slane %v768, 2
    %v770 = vmax.f32 %v768, %v769
    %v771 = vrot.slane %v770, 1
    %v772 = vmax.f32 %v770, %v771
    %v773 = vsel %vm737, %v685, -inf
    %v774 = vrot.slane %v773, 4
    %v775 = vmax.f32 %v773, %v774
    %v776 = vrot.slane %v775, 2
    %v777 = vmax.f32 %v775, %v776
    %v778 = vrot.slane %v777, 1
    %v779 = vmax.f32 %v777, %v778
    %v780 = vsel %vm737, %v684, -inf
    %v781 = vrot.slane %v780, 4
    %v782 = vmax.f32 %v780, %v781
    %v783 = vrot.slane %v782, 2
    %v784 = vmax.f32 %v782, %v783
    %v785 = vrot.slane %v784, 1
    %v786 = vmax.f32 %v784, %v785
    %v787 = vsel %vm737, %v686, -inf
    %v788 = vrot.slane %v787, 4
    %v789 = vmax.f32 %v787, %v788
    %v790 = vrot.slane %v789, 2
    %v791 = vmax.f32 %v789, %v790
    %v792 = vrot.slane %v791, 1
    %v793 = vmax.f32 %v791, %v792
    %v794 = vsel %vm737, %v694, -inf
    %v795 = vrot.slane %v794, 4
    %v796 = vmax.f32 %v794, %v795
    %v797 = vrot.slane %v796, 2
    %v798 = vmax.f32 %v796, %v797
    %v799 = vrot.slane %v798, 1
    %v800 = vmax.f32 %v798, %v799
    %v801 = vsel %vm737, %v702, -inf
    %v802 = vrot.slane %v801, 4
    %v803 = vmax.f32 %v801, %v802
    %v804 = vrot.slane %v803, 2
    %v805 = vmax.f32 %v803, %v804
    %v806 = vrot.slane %v805, 1
    %v807 = vmax.f32 %v805, %v806
    %v808 = vsel %vm737, %v701, -inf
    %v809 = vrot.slane %v808, 4
    %v810 = vmax.f32 %v808, %v809
    %v811 = vrot.slane %v810, 2
    %v812 = vmax.f32 %v810, %v811
    %v813 = vrot.slane %v812, 1
    %v814 = vmax.f32 %v812, %v813
    %v815 = vsel %vm737, %v703, -inf
    %v816 = vrot.slane %v815, 4
    %v817 = vmax.f32 %v815, %v816
    %v818 = vrot.slane %v817, 2
    %v819 = vmax.f32 %v817, %v818
    %v820 = vrot.slane %v819, 1
    %v821 = vmax.f32 %v819, %v820
    %v822 = vsel %vm737, %v711, -inf
    %v823 = vrot.slane %v822, 4
    %v824 = vmax.f32 %v822, %v823
    %v825 = vrot.slane %v824, 2
    %v826 = vmax.f32 %v824, %v825
    %v827 = vrot.slane %v826, 1
    %v828 = vmax.f32 %v826, %v827
    %v829 = vsel %vm737, %v719, -inf
    %v830 = vrot.slane %v829, 4
    %v831 = vmax.f32 %v829, %v830
    %v832 = vrot.slane %v831, 2
    %v833 = vmax.f32 %v831, %v832
    %v834 = vrot.slane %v833, 1
    %v835 = vmax.f32 %v833, %v834
    %v836 = vsel %vm737, %v718, -inf
    %v837 = vrot.slane %v836, 4
    %v838 = vmax.f32 %v836, %v837
    %v839 = vrot.slane %v838, 2
    %v840 = vmax.f32 %v838, %v839
    %v841 = vrot.slane %v840, 1
    %v842 = vmax.f32 %v840, %v841
    %v843 = vsel %vm737, %v720, -inf
    %v844 = vrot.slane %v843, 4
    %v845 = vmax.f32 %v843, %v844
    %v846 = vrot.slane %v845, 2
    %v847 = vmax.f32 %v845, %v846
    %v848 = vrot.slane %v847, 1
    %v849 = vmax.f32 %v847, %v848
    %vm864 = vcmask 1042434
    %v865 = vsel %vm864, %v751, %v744
    %vm866 = vcmask 1043459
    %v867 = vsel %vm866, %v758, %v865
    %vm868 = vcmask 1044484
    %v869 = vsel %vm868, %v765, %v867
    %vm870 = vcmask 1045509
    %v871 = vsel %vm870, %v772, %v869
    %vm872 = vcmask 1046534
    %v873 = vsel %vm872, %v779, %v871
    %vm874 = vcmask 1047559
    %v875 = vsel %vm874, %v786, %v873
    %v876 = vsel %vm864, %v807, %v800
    %v877 = vsel %vm866, %v814, %v876
    %v878 = vsel %vm868, %v821, %v877
    %v879 = vsel %vm870, %v828, %v878
    %v880 = vsel %vm872, %v835, %v879
    %v881 = vsel %vm874, %v842, %v880
    %v884 = vsel %vm294, 0.0, %v875
    %v885 = vsel %vm294, 0.0, %v881
    %v886 = vpack.c.bf16 %v885, %v884
    %v887 = vld [vmem:[#allocation5] sm:$0xf]
    %v888 = vld [vmem:[#allocation5 + $0x4] sm:$0xf]
    %v889 = vld [vmem:[#allocation5 + $0x8] sm:$0xf]
    %v890 = vld [vmem:[#allocation5 + $0xc] sm:$0xf]
    %v895 = vunpack.c.l.b16 %v887
    %v896 = vunpack.c.l.b16 %v888
    %v897 = vunpack.c.l.b16 %v889
    %v898 = vunpack.c.l.b16 %v890
    %v899 = vpack.c.b16 %v896, %v895
    %v900 = vpack.c.b16 %v898, %v897
    %v904 = vsel %vm234, %v886, 0
    %906 = vmatprep.subr.bf16.mxu0 0
    %907 = vmatpush1.bf16.msra.mxu0 0
    %908 = vmatprep.subr.bf16.mxu0 0
    %909 = vmatpush1.bf16.msra.mxu0 0
    %910 = vmatprep.subr.bf16.mxu0 0
    %911 = vmatpush1.bf16.msra.mxu0 0
    %912 = vmatprep.subr.bf16.mxu0 0
    %913 = vmatpush1.bf16.msra.mxu0 0
    %914 = vmatprep.subr.bf16.mxu0 0
    %915 = vmatpush1.bf16.msra.mxu0 0
    %916 = vmatprep.subr.bf16.mxu0 0
    %917 = vmatpush1.bf16.msra.mxu0 0
    %918 = vmatprep.subr.bf16.mxu0 0
    %919 = vmatpush1.bf16.msra.mxu0 %v900
    %920 = vmatprep.subr.bf16.mxu0 0
    %921 = vmatpush1.bf16.msra.mxu0 %v899
    %922 = vmatprep.subr.bf16.mxu0 0
    %923 = vmatpush2.bf16.msra.mxu0 0
    %924 = vmatprep.subr.bf16.mxu0 0
    %925 = vmatpush2.bf16.msra.mxu0 0
    %926 = vmatprep.subr.bf16.mxu0 0
    %927 = vmatpush2.bf16.msra.mxu0 0
    %928 = vmatprep.subr.bf16.mxu0 0
    %929 = vmatpush2.bf16.msra.mxu0 0
    %930 = vmatprep.subr.bf16.mxu0 0
    %931 = vmatpush2.bf16.msra.mxu0 0
    %932 = vmatprep.subr.bf16.mxu0 0
    %933 = vmatpush2.bf16.msra.mxu0 0
    %934 = vmatprep.subr.bf16.mxu0 0
    %935 = vmatpush2.bf16.msra.mxu0 0
    %936 = vmatprep.subr.bf16.mxu0 0
    %937 = vmatpush2.bf16.msra.mxu0 0
    %938 = vmatprep.mubr.bf16.mxu0 0
    %939 = vmatmul.mubr.bf16.gmra.mxu0 %v904
    %v940 = vpop.f32.mrf.mxu0
    %v941 = vadd.f32 0.0, %v940
    %v942 = vpop.f32.mrf.mxu0
    %v943 = vpop.f32.mrf.mxu0
    %v944 = vadd.f32 0.0, %v943
    %v945 = vpop.f32.mrf.mxu0
    %946 = vdwg.mxu0
    %v947 = vadd.f32 %v118, %v941
    %v948 = vadd.f32 %v118, %v944
    %v949 = vpack.c.bf16 %v744, %v744
    %v950 = vpack.c.bf16 %v751, %v751
    %v951 = vpack.c.bf16 %v758, %v758
    %v952 = vpack.c.bf16 %v765, %v765
    %v953 = vpack.c.bf16 %v772, %v772
    %v954 = vpack.c.bf16 %v779, %v779
    %v955 = vpack.c.bf16 %v786, %v786
    %v956 = vpack.c.bf16 %v793, %v793
    %v957 = vpack.c.bf16 %v800, %v800
    %v958 = vpack.c.bf16 %v807, %v807
    %v959 = vpack.c.bf16 %v814, %v814
    %v960 = vpack.c.bf16 %v821, %v821
    %v961 = vpack.c.bf16 %v828, %v828
    %v962 = vpack.c.bf16 %v835, %v835
    %v963 = vpack.c.bf16 %v842, %v842
    %v964 = vpack.c.bf16 %v849, %v849
    %s965 = scalar_lea.vmem [#allocation5], 16
    %v966 = vld [vmem:[%s965] sm:$0xf]
    %v967 = vld [vmem:[%s965 + $0x4] sm:$0xf]
    %v968 = vld [vmem:[%s965 + $0x8] sm:$0xf]
    %v969 = vld [vmem:[%s965 + $0xc] sm:$0xf]
    %v986 = vunpack.c.l.b16 %v949
    %v987 = vunpack.c.l.b16 %v950
    %v988 = vunpack.c.l.b16 %v951
    %v989 = vunpack.c.l.b16 %v952
    %v990 = vunpack.c.l.b16 %v953
    %v991 = vunpack.c.l.b16 %v954
    %v992 = vunpack.c.l.b16 %v955
    %v993 = vunpack.c.l.b16 %v956
    %v994 = vunpack.c.l.b16 %v957
    %v995 = vunpack.c.l.b16 %v958
    %v996 = vunpack.c.l.b16 %v959
    %v997 = vunpack.c.l.b16 %v960
    %v998 = vunpack.c.l.b16 %v961
    %v999 = vunpack.c.l.b16 %v962
    %v1000 = vunpack.c.l.b16 %v963
    %v1001 = vunpack.c.l.b16 %v964
    %vm1002 = vcmask 1041409
    %v1003 = vsel %vm1002, %v987, %v986
    %v1004 = vsel %vm864, %v988, %v1003
    %v1005 = vsel %vm866, %v989, %v1004
    %v1006 = vsel %vm868, %v990, %v1005
    %v1007 = vsel %vm870, %v991, %v1006
    %v1008 = vsel %vm872, %v992, %v1007
    %v1009 = vsel %vm874, %v993, %v1008
    %v1010 = vsel %vm1002, %v995, %v994
    %v1011 = vsel %vm864, %v996, %v1010
    %v1012 = vsel %vm866, %v997, %v1011
    %v1013 = vsel %vm868, %v998, %v1012
    %v1014 = vsel %vm870, %v999, %v1013
    %v1015 = vsel %vm872, %v1000, %v1014
    %v1016 = vsel %vm874, %v1001, %v1015
    %v1017 = vpack.c.b16 %v1016, %v1009
    %v1022 = vunpack.c.l.b16 %v966
    %v1023 = vunpack.c.l.b16 %v967
    %v1024 = vunpack.c.l.b16 %v968
    %v1025 = vunpack.c.l.b16 %v969
    %v1026 = vpack.c.b16 %v1023, %v1022
    %v1027 = vpack.c.b16 %v1025, %v1024
    %v1031 = vsel %vm234, %v1017, 0
    %1033 = vmatprep.subr.bf16.mxu0 0
    %1034 = vmatpush1.bf16.msra.mxu0 0
    %1035 = vmatprep.subr.bf16.mxu0 0
    %1036 = vmatpush1.bf16.msra.mxu0 0
    %1037 = vmatprep.subr.bf16.mxu0 0
    %1038 = vmatpush1.bf16.msra.mxu0 0
    %1039 = vmatprep.subr.bf16.mxu0 0
    %1040 = vmatpush1.bf16.msra.mxu0 0
    %1041 = vmatprep.subr.bf16.mxu0 0
    %1042 = vmatpush1.bf16.msra.mxu0 0
    %1043 = vmatprep.subr.bf16.mxu0 0
    %1044 = vmatpush1.bf16.msra.mxu0 0
    %1045 = vmatprep.subr.bf16.mxu0 0
    %1046 = vmatpush1.bf16.msra.mxu0 %v1027
    %1047 = vmatprep.subr.bf16.mxu0 0
    %1048 = vmatpush1.bf16.msra.mxu0 %v1026
    %1049 = vmatprep.subr.bf16.mxu0 0
    %1050 = vmatpush2.bf16.msra.mxu0 0
    %1051 = vmatprep.subr.bf16.mxu0 0
    %1052 = vmatpush2.bf16.msra.mxu0 0
    %1053 = vmatprep.subr.bf16.mxu0 0
    %1054 = vmatpush2.bf16.msra.mxu0 0
    %1055 = vmatprep.subr.bf16.mxu0 0
    %1056 = vmatpush2.bf16.msra.mxu0 0
    %1057 = vmatprep.subr.bf16.mxu0 0
    %1058 = vmatpush2.bf16.msra.mxu0 0
    %1059 = vmatprep.subr.bf16.mxu0 0
    %1060 = vmatpush2.bf16.msra.mxu0 0
    %1061 = vmatprep.subr.bf16.mxu0 0
    %1062 = vmatpush2.bf16.msra.mxu0 0
    %1063 = vmatprep.subr.bf16.mxu0 0
    %1064 = vmatpush2.bf16.msra.mxu0 0
    %1065 = vmatprep.mubr.bf16.mxu0 0
    %1066 = vmatmul.mubr.bf16.gmra.mxu0 %v1031
    %v1067 = vpop.f32.mrf.mxu0
    %v1068 = vadd.f32 0.0, %v1067
    %v1069 = vpop.f32.mrf.mxu0
    %v1070 = vpop.f32.mrf.mxu0
    %v1071 = vadd.f32 0.0, %v1070
    %v1072 = vpop.f32.mrf.mxu0
    %1073 = vdwg.mxu0
    %v1074 = vadd.f32 %v947, %v1068
    %v1075 = vadd.f32 %v948, %v1071
    %v1078 = vsel %vm1002, %v758, %v751
    %v1079 = vsel %vm864, %v765, %v1078
    %v1080 = vsel %vm866, %v772, %v1079
    %v1081 = vsel %vm868, %v779, %v1080
    %v1082 = vsel %vm870, %v786, %v1081
    %v1083 = vsel %vm872, %v793, %v1082
    %v1084 = vsel %vm1002, %v814, %v807
    %v1085 = vsel %vm864, %v821, %v1084
    %v1086 = vsel %vm866, %v828, %v1085
    %v1087 = vsel %vm868, %v835, %v1086
    %v1088 = vsel %vm870, %v842, %v1087
    %v1089 = vsel %vm872, %v849, %v1088
    %v1092 = vsel %vm463, %v1083, 0.0
    %v1093 = vsel %vm463, %v1089, 0.0
    %v1094 = vpack.c.bf16 %v1093, %v1092
    %s1095 = scalar_lea.vmem [#allocation5], 32
    %v1096 = vld [vmem:[%s1095] sm:$0xf]
    %v1097 = vld [vmem:[%s1095 + $0x4] sm:$0xf]
    %v1098 = vld [vmem:[%s1095 + $0x8] sm:$0xf]
    %v1099 = vld [vmem:[%s1095 + $0xc] sm:$0xf]
    %v1104 = vunpack.c.l.b16 %v1096
    %v1105 = vunpack.c.l.b16 %v1097
    %v1106 = vunpack.c.l.b16 %v1098
    %v1107 = vunpack.c.l.b16 %v1099
    %v1108 = vpack.c.b16 %v1105, %v1104
    %v1109 = vpack.c.b16 %v1107, %v1106
    %v1113 = vsel %vm234, %v1094, 0
    %1115 = vmatprep.subr.bf16.mxu0 0
    %1116 = vmatpush1.bf16.msra.mxu0 0
    %1117 = vmatprep.subr.bf16.mxu0 0
    %1118 = vmatpush1.bf16.msra.mxu0 0
    %1119 = vmatprep.subr.bf16.mxu0 0
    %1120 = vmatpush1.bf16.msra.mxu0 0
    %1121 = vmatprep.subr.bf16.mxu0 0
    %1122 = vmatpush1.bf16.msra.mxu0 0
    %1123 = vmatprep.subr.bf16.mxu0 0
    %1124 = vmatpush1.bf16.msra.mxu0 0
    %1125 = vmatprep.subr.bf16.mxu0 0
    %1126 = vmatpush1.bf16.msra.mxu0 0
    %1127 = vmatprep.subr.bf16.mxu0 0
    %1128 = vmatpush1.bf16.msra.mxu0 %v1109
    %1129 = vmatprep.subr.bf16.mxu0 0
    %1130 = vmatpush1.bf16.msra.mxu0 %v1108
    %1131 = vmatprep.subr.bf16.mxu0 0
    %1132 = vmatpush2.bf16.msra.mxu0 0
    %1133 = vmatprep.subr.bf16.mxu0 0
    %1134 = vmatpush2.bf16.msra.mxu0 0
    %1135 = vmatprep.subr.bf16.mxu0 0
    %1136 = vmatpush2.bf16.msra.mxu0 0
    %1137 = vmatprep.subr.bf16.mxu0 0
    %1138 = vmatpush2.bf16.msra.mxu0 0
    %1139 = vmatprep.subr.bf16.mxu0 0
    %1140 = vmatpush2.bf16.msra.mxu0 0
    %1141 = vmatprep.subr.bf16.mxu0 0
    %1142 = vmatpush2.bf16.msra.mxu0 0
    %1143 = vmatprep.subr.bf16.mxu0 0
    %1144 = vmatpush2.bf16.msra.mxu0 0
    %1145 = vmatprep.subr.bf16.mxu0 0
    %1146 = vmatpush2.bf16.msra.mxu0 0
    %1147 = vmatprep.mubr.bf16.mxu0 0
    %1148 = vmatmul.mubr.bf16.gmra.mxu0 %v1113
    %v1149 = vpop.f32.mrf.mxu0
    %v1150 = vadd.f32 0.0, %v1149
    %v1151 = vpop.f32.mrf.mxu0
    %v1152 = vpop.f32.mrf.mxu0
    %v1153 = vadd.f32 0.0, %v1152
    %v1154 = vpop.f32.mrf.mxu0
    %1155 = vdwg.mxu0
    %v1156 = vadd.f32 %v1074, %v1150
    %v1157 = vadd.f32 %v1075, %v1153
    %v1158 = vmax.f32 %v1156, 0.0
    %v1159 = vmax.f32 %v1157, 0.0
    %v1162 = vcombine.high %v1158, %v1158
    %v1164 = vunpack.c.l.s4 1983009808
    %v1165 = vunpack.c.0.s8 %v1164
    %v1166 = vlaneseq
    %v1167 = vshrl.u32 %v1166, 7
    %v1168 = vsub.s32 %v1165, %v1167
    %v1169 = vrot.slane %v1158, %v1168
    %v1171 = vunpack.c.l.s4 1983009808
    %v1172 = vunpack.c.0.s8 %v1171
    %v1173 = vlaneseq
    %v1174 = vshrl.u32 %v1173, 7
    %v1175 = vsub.s32 %v1172, %v1174
    %v1176 = vrot.slane %v1162, %v1175
    %v1177 = vcombine.high %v1169, %v1169
    %v1178 = vcombine.high %v1176, %v1176
    %v1179 = vcombine.high %v1159, %v1159
    %v1181 = vunpack.c.l.s4 1983009808
    %v1182 = vunpack.c.0.s8 %v1181
    %v1183 = vlaneseq
    %v1184 = vshrl.u32 %v1183, 7
    %v1185 = vsub.s32 %v1182, %v1184
    %v1186 = vrot.slane %v1159, %v1185
    %v1188 = vunpack.c.l.s4 1983009808
    %v1189 = vunpack.c.0.s8 %v1188
    %v1190 = vlaneseq
    %v1191 = vshrl.u32 %v1190, 7
    %v1192 = vsub.s32 %v1189, %v1191
    %v1193 = vrot.slane %v1179, %v1192
    %v1194 = vcombine.high %v1186, %v1186
    %v1195 = vcombine.high %v1193, %v1193
    %vm1204 = vcmask 517120
    %v1205 = vsel %vm1204, %v1169, -inf
    %v1206 = vrot.slane %v1205, 4
    %v1207 = vmax.f32 %v1205, %v1206
    %v1208 = vrot.slane %v1207, 2
    %v1209 = vmax.f32 %v1207, %v1208
    %v1210 = vrot.slane %v1209, 1
    %v1211 = vmax.f32 %v1209, %v1210
    %v1212 = vsel %vm1204, %v1177, -inf
    %v1213 = vrot.slane %v1212, 4
    %v1214 = vmax.f32 %v1212, %v1213
    %v1215 = vrot.slane %v1214, 2
    %v1216 = vmax.f32 %v1214, %v1215
    %v1217 = vrot.slane %v1216, 1
    %v1218 = vmax.f32 %v1216, %v1217
    %v1219 = vsel %vm1204, %v1176, -inf
    %v1220 = vrot.slane %v1219, 4
    %v1221 = vmax.f32 %v1219, %v1220
    %v1222 = vrot.slane %v1221, 2
    %v1223 = vmax.f32 %v1221, %v1222
    %v1224 = vrot.slane %v1223, 1
    %v1225 = vmax.f32 %v1223, %v1224
    %v1226 = vsel %vm1204, %v1178, -inf
    %v1227 = vrot.slane %v1226, 4
    %v1228 = vmax.f32 %v1226, %v1227
    %v1229 = vrot.slane %v1228, 2
    %v1230 = vmax.f32 %v1228, %v1229
    %v1231 = vrot.slane %v1230, 1
    %v1232 = vmax.f32 %v1230, %v1231
    %v1233 = vsel %vm1204, %v1186, -inf
    %v1234 = vrot.slane %v1233, 4
    %v1235 = vmax.f32 %v1233, %v1234
    %v1236 = vrot.slane %v1235, 2
    %v1237 = vmax.f32 %v1235, %v1236
    %v1238 = vrot.slane %v1237, 1
    %v1239 = vmax.f32 %v1237, %v1238
    %v1240 = vsel %vm1204, %v1194, -inf
    %v1241 = vrot.slane %v1240, 4
    %v1242 = vmax.f32 %v1240, %v1241
    %v1243 = vrot.slane %v1242, 2
    %v1244 = vmax.f32 %v1242, %v1243
    %v1245 = vrot.slane %v1244, 1
    %v1246 = vmax.f32 %v1244, %v1245
    %v1247 = vsel %vm1204, %v1193, -inf
    %v1248 = vrot.slane %v1247, 4
    %v1249 = vmax.f32 %v1247, %v1248
    %v1250 = vrot.slane %v1249, 2
    %v1251 = vmax.f32 %v1249, %v1250
    %v1252 = vrot.slane %v1251, 1
    %v1253 = vmax.f32 %v1251, %v1252
    %v1254 = vsel %vm1204, %v1195, -inf
    %v1255 = vrot.slane %v1254, 4
    %v1256 = vmax.f32 %v1254, %v1255
    %v1257 = vrot.slane %v1256, 2
    %v1258 = vmax.f32 %v1256, %v1257
    %v1259 = vrot.slane %v1258, 1
    %v1260 = vmax.f32 %v1258, %v1259
    %v1267 = vsel %vm864, %v1218, %v1211
    %v1268 = vsel %vm866, %v1225, %v1267
    %v1269 = vsel %vm864, %v1246, %v1239
    %v1270 = vsel %vm866, %v1253, %v1269
    %v1273 = vsel %vm294, 0.0, %v1268
    %v1274 = vsel %vm294, 0.0, %v1270
    %v1276 = vcombine.high %v126, %v126
    %v1278 = vmul.f32 %v1273, %v126
    %v1279 = vmul.f32 %v1274, %v1276
    %v1282 = vcombine.low %v1278, %v1279
    %v1284 = vadd.f32 %v119, %v1282
    %v1285 = vmul.f32 %v1211, %v127
    %v1286 = vmul.f32 %v1218, %v127
    %v1287 = vmul.f32 %v1225, %v127
    %v1288 = vmul.f32 %v1232, %v127
    %v1289 = vmul.f32 %v1239, %v127
    %v1290 = vmul.f32 %v1246, %v127
    %v1291 = vmul.f32 %v1253, %v127
    %v1292 = vmul.f32 %v1260, %v127
    %v1301 = vrot.slane %v1286, 7
    %v1302 = vsel %vm1002, %v1301, %v1285
    %v1303 = vrot.slane %v1287, 6
    %v1304 = vsel %vm864, %v1303, %v1302
    %v1305 = vrot.slane %v1288, 5
    %v1306 = vsel %vm866, %v1305, %v1304
    %v1307 = vrot.slane %v1289, 4
    %v1308 = vsel %vm868, %v1307, %v1306
    %v1309 = vrot.slane %v1290, 3
    %v1310 = vsel %vm870, %v1309, %v1308
    %v1311 = vrot.slane %v1291, 2
    %v1312 = vsel %vm872, %v1311, %v1310
    %v1313 = vrot.slane %v1292, 1
    %v1314 = vsel %vm874, %v1313, %v1312
    %v1316 = vadd.f32 %v1284, %v1314
    %v1319 = vsel %vm1002, %v1225, %v1218
    %v1320 = vsel %vm864, %v1232, %v1319
    %v1321 = vsel %vm1002, %v1253, %v1246
    %v1322 = vsel %vm864, %v1260, %v1321
    %vm1325 = vcmask 1042432
    %v1326 = vsel %vm1325, %v1320, 0.0
    %v1327 = vsel %vm1325, %v1322, 0.0
    %v1329 = vcombine.high %v128, %v128
    %v1331 = vmul.f32 %v1326, %v128
    %v1332 = vmul.f32 %v1327, %v1329
    %v1335 = vcombine.low %v1331, %v1332
    %v1337 = vadd.f32 %v1316, %v1335
    %v1338 = vpack.c.bf16 %v1337, %v1337
    %v1339 = vld [vmem:[#allocation7] sm:$0xf]
    %v1340 = vld [vmem:[#allocation7 + $0x4] sm:$0xf]
    %v1341 = vld [vmem:[#allocation7 + $0x8] sm:$0xf]
    %v1342 = vld [vmem:[#allocation7 + $0xc] sm:$0xf]
    %v1343 = vld [vmem:[#allocation7 + $0x10] sm:$0xf]
    %v1344 = vld [vmem:[#allocation7 + $0x14] sm:$0xf]
    %v1345 = vld [vmem:[#allocation7 + $0x18] sm:$0xf]
    %v1346 = vld [vmem:[#allocation7 + $0x1c] sm:$0xf]
    %v1355 = vunpack.c.l.b16 %v1339
    %v1356 = vunpack.c.l.b16 %v1340
    %v1357 = vunpack.c.l.b16 %v1341
    %v1358 = vunpack.c.l.b16 %v1342
    %v1359 = vunpack.c.l.b16 %v1343
    %v1360 = vunpack.c.l.b16 %v1344
    %v1361 = vunpack.c.l.b16 %v1345
    %v1362 = vunpack.c.l.b16 %v1346
    %v1363 = vpack.c.b16 %v1356, %v1355
    %v1364 = vpack.c.b16 %v1358, %v1357
    %v1365 = vpack.c.b16 %v1360, %v1359
    %v1366 = vpack.c.b16 %v1362, %v1361
    %vm1371 = vcmask 523264
    %v1373 = vsel %vm1371, %v1338, 0
    %1375 = vmatprep.subr.bf16.mxu0 0
    %1376 = vmatpush1.bf16.msra.mxu0 0
    %1377 = vmatprep.subr.bf16.mxu0 0
    %1378 = vmatpush1.bf16.msra.mxu0 0
    %1379 = vmatprep.subr.bf16.mxu0 0
    %1380 = vmatpush1.bf16.msra.mxu0 0
    %1381 = vmatprep.subr.bf16.mxu0 0
    %1382 = vmatpush1.bf16.msra.mxu0 0
    %1383 = vmatprep.subr.bf16.mxu0 0
    %1384 = vmatpush1.bf16.msra.mxu0 %v1366
    %1385 = vmatprep.subr.bf16.mxu0 0
    %1386 = vmatpush1.bf16.msra.mxu0 %v1365
    %1387 = vmatprep.subr.bf16.mxu0 0
    %1388 = vmatpush1.bf16.msra.mxu0 %v1364
    %1389 = vmatprep.subr.bf16.mxu0 0
    %1390 = vmatpush1.bf16.msra.mxu0 %v1363
    %1391 = vmatprep.subr.bf16.mxu0 0
    %1392 = vmatpush2.bf16.msra.mxu0 0
    %1393 = vmatprep.subr.bf16.mxu0 0
    %1394 = vmatpush2.bf16.msra.mxu0 0
    %1395 = vmatprep.subr.bf16.mxu0 0
    %1396 = vmatpush2.bf16.msra.mxu0 0
    %1397 = vmatprep.subr.bf16.mxu0 0
    %1398 = vmatpush2.bf16.msra.mxu0 0
    %1399 = vmatprep.subr.bf16.mxu0 0
    %1400 = vmatpush2.bf16.msra.mxu0 0
    %1401 = vmatprep.subr.bf16.mxu0 0
    %1402 = vmatpush2.bf16.msra.mxu0 0
    %1403 = vmatprep.subr.bf16.mxu0 0
    %1404 = vmatpush2.bf16.msra.mxu0 0
    %1405 = vmatprep.subr.bf16.mxu0 0
    %1406 = vmatpush2.bf16.msra.mxu0 0
    %1407 = vmatprep.mubr.bf16.mxu0 0
    %1408 = vmatmul.mubr.bf16.gmra.mxu0 %v1373
    %v1409 = vpop.f32.mrf.mxu0
    %v1410 = vadd.f32 %v120, %v1409
    %v1411 = vpop.f32.mrf.mxu0
    %v1412 = vpop.f32.mrf.mxu0
    %v1413 = vpop.f32.mrf.mxu0
    %1414 = vdwg.mxu0
    %v1415 = vmax.f32 %v1410, 0.0
    %v1417 = vcombine.high %v1415, %v1415
    %vm1419 = vcmask 1043456
    %v1420 = vsel %vm1419, %v1415, 0.0
    %v1421 = vrot.slane %v1420, 4
    %v1422 = vadd.f32 %v1420, %v1421
    %v1423 = vrot.slane %v1422, 2
    %v1424 = vadd.f32 %v1422, %v1423
    %v1425 = vrot.slane %v1424, 1
    %v1426 = vadd.f32 %v1424, %v1425
    %v1427 = vsel %vm1419, %v1417, 0.0
    %v1428 = vrot.slane %v1427, 4
    %v1429 = vadd.f32 %v1427, %v1428
    %v1430 = vrot.slane %v1429, 2
    %v1431 = vadd.f32 %v1429, %v1430
    %v1432 = vrot.slane %v1431, 1
    %v1433 = vadd.f32 %v1431, %v1432
    %v1434 = vrcp.pop 4.0
    %v1435 = vmul.f32 %v1426, %v1434
    %v1436 = vmul.f32 %v1433, %v1434
    %v1437 = vpack.c.bf16 %v1435, %v1435
    %v1438 = vpack.c.bf16 %v1436, %v1436
    %v1439 = vld [vmem:[#allocation8] sm:$0xff]
    %v1440 = vld [vmem:[#allocation8 + $0x8] sm:$0xf]
    %v1441 = vld [vmem:[#allocation8 + $0xc] sm:$0xff]
    %v1442 = vld [vmem:[#allocation8 + $0x14] sm:$0xf]
    %v1443 = vld [vmem:[#allocation8 + $0x18] sm:$0xff]
    %v1444 = vld [vmem:[#allocation8 + $0x20] sm:$0xf]
    %v1445 = vld [vmem:[#allocation8 + $0x24] sm:$0xff]
    %v1446 = vld [vmem:[#allocation8 + $0x2c] sm:$0xf]
    %v1447 = vld [vmem:[#allocation8 + $0x30] sm:$0xff]
    %v1448 = vld [vmem:[#allocation8 + $0x38] sm:$0xf]
    %v1449 = vld [vmem:[#allocation8 + $0x3c] sm:$0xff]
    %v1450 = vld [vmem:[#allocation8 + $0x44] sm:$0xf]
    %v1451 = vld [vmem:[#allocation8 + $0x48] sm:$0xff]
    %v1452 = vld [vmem:[#allocation8 + $0x50] sm:$0xf]
    %v1453 = vld [vmem:[#allocation8 + $0x54] sm:$0xff]
    %v1454 = vld [vmem:[#allocation8 + $0x5c] sm:$0xf]
    %v1455 = vld [vmem:[#allocation8 + $0x60] sm:$0xff]
    %v1456 = vld [vmem:[#allocation8 + $0x68] sm:$0xf]
    %v1457 = vld [vmem:[#allocation8 + $0x6c] sm:$0xff]
    %v1458 = vld [vmem:[#allocation8 + $0x74] sm:$0xf]
    %v1459 = vld [vmem:[#allocation8 + $0x78] sm:$0xff]
    %v1460 = vld [vmem:[#allocation8 + $0x80] sm:$0xf]
    %v1461 = vld [vmem:[#allocation8 + $0x84] sm:$0xff]
    %v1462 = vld [vmem:[#allocation8 + $0x8c] sm:$0xf]
    %v1463 = vld [vmem:[#allocation8 + $0x90] sm:$0xff]
    %v1464 = vld [vmem:[#allocation8 + $0x98] sm:$0xf]
    %v1465 = vld [vmem:[#allocation8 + $0x9c] sm:$0xff]
    %v1466 = vld [vmem:[#allocation8 + $0xa4] sm:$0xf]
    %v1467 = vld [vmem:[#allocation8 + $0xa8] sm:$0xff]
    %v1468 = vld [vmem:[#allocation8 + $0xb0] sm:$0xf]
    %v1469 = vld [vmem:[#allocation8 + $0xb4] sm:$0xff]
    %v1470 = vld [vmem:[#allocation8 + $0xbc] sm:$0xf]
    %v1472 = vlaneseq
    %v1473 = vshrl.u32 %v1472, 7
    %v1474 = vsub.s32 0, %v1473
    %v1475 = vrot.slane %v122, %v1474
    %v1476 = vlaneseq
    %v1477 = vshrl.u32 %v1476, 7
    %v1478 = vsub.s32 1, %v1477
    %v1479 = vrot.slane %v122, %v1478
    %v1480 = vlaneseq
    %v1481 = vshrl.u32 %v1480, 7
    %v1482 = vsub.s32 2, %v1481
    %v1483 = vrot.slane %v122, %v1482
    %v1489 = vunpack.c.l.b16 %v1437
    %v1490 = vunpack.c.l.b16 %v1438
    %v1491 = vsel %vm1002, %v1490, %v1489
    %v1492 = vpack.c.b16 %v1491, %v1491
    %v1526 = vunpack.c.l.b16 %v1439
    %v1527 = vunpack.c.h.b16 %v1439
    %v1528 = vunpack.c.l.b16 %v1440
    %v1529 = vunpack.c.l.b16 %v1441
    %v1530 = vunpack.c.h.b16 %v1441
    %v1531 = vunpack.c.l.b16 %v1442
    %v1532 = vunpack.c.l.b16 %v1443
    %v1533 = vunpack.c.h.b16 %v1443
    %v1534 = vunpack.c.l.b16 %v1444
    %v1535 = vunpack.c.l.b16 %v1445
    %v1536 = vunpack.c.h.b16 %v1445
    %v1537 = vunpack.c.l.b16 %v1446
    %v1538 = vunpack.c.l.b16 %v1447
    %v1539 = vunpack.c.h.b16 %v1447
    %v1540 = vunpack.c.l.b16 %v1448
    %v1541 = vunpack.c.l.b16 %v1449
    %v1542 = vunpack.c.h.b16 %v1449
    %v1543 = vunpack.c.l.b16 %v1450
    %v1544 = vunpack.c.l.b16 %v1451
    %v1545 = vunpack.c.h.b16 %v1451
    %v1546 = vunpack.c.l.b16 %v1452
    %v1547 = vunpack.c.l.b16 %v1453
    %v1548 = vunpack.c.h.b16 %v1453
    %v1549 = vunpack.c.l.b16 %v1454
    %v1550 = vunpack.c.l.b16 %v1455
    %v1551 = vunpack.c.h.b16 %v1455
    %v1552 = vunpack.c.l.b16 %v1456
    %v1553 = vunpack.c.l.b16 %v1457
    %v1554 = vunpack.c.h.b16 %v1457
    %v1555 = vunpack.c.l.b16 %v1458
    %v1556 = vunpack.c.l.b16 %v1459
    %v1557 = vunpack.c.h.b16 %v1459
    %v1558 = vunpack.c.l.b16 %v1460
    %v1559 = vunpack.c.l.b16 %v1461
    %v1560 = vunpack.c.h.b16 %v1461
    %v1561 = vunpack.c.l.b16 %v1462
    %v1562 = vunpack.c.l.b16 %v1463
    %v1563 = vunpack.c.h.b16 %v1463
    %v1564 = vunpack.c.l.b16 %v1464
    %v1565 = vunpack.c.l.b16 %v1465
    %v1566 = vunpack.c.h.b16 %v1465
    %v1567 = vunpack.c.l.b16 %v1466
    %v1568 = vunpack.c.l.b16 %v1467
    %v1569 = vunpack.c.h.b16 %v1467
    %v1570 = vunpack.c.l.b16 %v1468
    %v1571 = vunpack.c.l.b16 %v1469
    %v1572 = vunpack.c.h.b16 %v1469
    %v1573 = vunpack.c.l.b16 %v1470
    %v1574 = vpack.c.b16 %v1529, %v1526
    %v1575 = vpack.c.b16 %v1530, %v1527
    %v1576 = vpack.c.b16 %v1531, %v1528
    %v1577 = vpack.c.b16 %v1535, %v1532
    %v1578 = vpack.c.b16 %v1536, %v1533
    %v1579 = vpack.c.b16 %v1537, %v1534
    %v1580 = vpack.c.b16 %v1541, %v1538
    %v1581 = vpack.c.b16 %v1542, %v1539
    %v1582 = vpack.c.b16 %v1543, %v1540
    %v1583 = vpack.c.b16 %v1547, %v1544
    %v1584 = vpack.c.b16 %v1548, %v1545
    %v1585 = vpack.c.b16 %v1549, %v1546
    %v1586 = vpack.c.b16 %v1553, %v1550
    %v1587 = vpack.c.b16 %v1554, %v1551
    %v1588 = vpack.c.b16 %v1555, %v1552
    %v1589 = vpack.c.b16 %v1559, %v1556
    %v1590 = vpack.c.b16 %v1560, %v1557
    %v1591 = vpack.c.b16 %v1561, %v1558
    %v1592 = vpack.c.b16 %v1565, %v1562
    %v1593 = vpack.c.b16 %v1566, %v1563
    %v1594 = vpack.c.b16 %v1567, %v1564
    %v1595 = vpack.c.b16 %v1571, %v1568
    %v1596 = vpack.c.b16 %v1572, %v1569
    %v1597 = vpack.c.b16 %v1573, %v1570
    %1622 = vmatprep.subr.bf16.mxu0 %v1596
    %1623 = vmatpush1.bf16.msra.mxu0 %v1595
    %1624 = vmatprep.subr.bf16.mxu0 %v1593
    %1625 = vmatpush1.bf16.msra.mxu0 %v1592
    %1626 = vmatprep.subr.bf16.mxu0 %v1590
    %1627 = vmatpush1.bf16.msra.mxu0 %v1589
    %1628 = vmatprep.subr.bf16.mxu0 %v1587
    %1629 = vmatpush1.bf16.msra.mxu0 %v1586
    %1630 = vmatprep.subr.bf16.mxu0 %v1584
    %1631 = vmatpush1.bf16.msra.mxu0 %v1583
    %1632 = vmatprep.subr.bf16.mxu0 %v1581
    %1633 = vmatpush1.bf16.msra.mxu0 %v1580
    %1634 = vmatprep.subr.bf16.mxu0 %v1578
    %1635 = vmatpush1.bf16.msra.mxu0 %v1577
    %1636 = vmatprep.subr.bf16.mxu0 %v1575
    %1637 = vmatpush1.bf16.msra.mxu0 %v1574
    %1638 = vmatprep.subr.bf16.mxu0 0
    %1639 = vmatpush2.bf16.msra.mxu0 0
    %1640 = vmatprep.subr.bf16.mxu0 0
    %1641 = vmatpush2.bf16.msra.mxu0 0
    %1642 = vmatprep.subr.bf16.mxu0 0
    %1643 = vmatpush2.bf16.msra.mxu0 0
    %1644 = vmatprep.subr.bf16.mxu0 0
    %1645 = vmatpush2.bf16.msra.mxu0 0
    %1646 = vmatprep.subr.bf16.mxu0 0
    %1647 = vmatpush2.bf16.msra.mxu0 0
    %1648 = vmatprep.subr.bf16.mxu0 0
    %1649 = vmatpush2.bf16.msra.mxu0 0
    %1650 = vmatprep.subr.bf16.mxu0 0
    %1651 = vmatpush2.bf16.msra.mxu0 0
    %1652 = vmatprep.subr.bf16.mxu0 0
    %1653 = vmatpush2.bf16.msra.mxu0 0
    %1654 = vmatprep.mubr.bf16.mxu0 0
    %1655 = vmatmul.mubr.bf16.gmra.mxu0 %v1492
    %v1656 = vpop.f32.mrf.mxu0
    %v1657 = vadd.f32 %v1475, %v1656
    %v1658 = vpop.f32.mrf.mxu0
    %v1659 = vadd.f32 %v1479, %v1658
    %v1660 = vpop.f32.mrf.mxu0
    %v1661 = vpop.f32.mrf.mxu0
    %1662 = vdwg.mxu0
    %1663 = vmatprep.subr.bf16.mxu0 0
    %1664 = vmatpush1.bf16.msra.mxu0 %v1597
    %1665 = vmatprep.subr.bf16.mxu0 0
    %1666 = vmatpush1.bf16.msra.mxu0 %v1594
    %1667 = vmatprep.subr.bf16.mxu0 0
    %1668 = vmatpush1.bf16.msra.mxu0 %v1591
    %1669 = vmatprep.subr.bf16.mxu0 0
    %1670 = vmatpush1.bf16.msra.mxu0 %v1588
    %1671 = vmatprep.subr.bf16.mxu0 0
    %1672 = vmatpush1.bf16.msra.mxu0 %v1585
    %1673 = vmatprep.subr.bf16.mxu0 0
    %1674 = vmatpush1.bf16.msra.mxu0 %v1582
    %1675 = vmatprep.subr.bf16.mxu0 0
    %1676 = vmatpush1.bf16.msra.mxu0 %v1579
    %1677 = vmatprep.subr.bf16.mxu0 0
    %1678 = vmatpush1.bf16.msra.mxu0 %v1576
    %1679 = vmatprep.subr.bf16.mxu0 0
    %1680 = vmatpush2.bf16.msra.mxu0 0
    %1681 = vmatprep.subr.bf16.mxu0 0
    %1682 = vmatpush2.bf16.msra.mxu0 0
    %1683 = vmatprep.subr.bf16.mxu0 0
    %1684 = vmatpush2.bf16.msra.mxu0 0
    %1685 = vmatprep.subr.bf16.mxu0 0
    %1686 = vmatpush2.bf16.msra.mxu0 0
    %1687 = vmatprep.subr.bf16.mxu0 0
    %1688 = vmatpush2.bf16.msra.mxu0 0
    %1689 = vmatprep.subr.bf16.mxu0 0
    %1690 = vmatpush2.bf16.msra.mxu0 0
    %1691 = vmatprep.subr.bf16.mxu0 0
    %1692 = vmatpush2.bf16.msra.mxu0 0
    %1693 = vmatprep.subr.bf16.mxu0 0
    %1694 = vmatpush2.bf16.msra.mxu0 0
    %1695 = vmatprep.mubr.bf16.mxu0 0
    %1696 = vmatmul.mubr.bf16.gmra.mxu0 %v1492
    %v1697 = vpop.f32.mrf.mxu0
    %v1698 = vadd.f32 %v1483, %v1697
    %v1699 = vpop.f32.mrf.mxu0
    %v1700 = vpop.f32.mrf.mxu0
    %v1701 = vpop.f32.mrf.mxu0
    %1702 = vdwg.mxu0
    %v1703 = vxor.u32 %v1657, 2147483648
    %v1704 = vmul.f32 %v1703, 1.442695
    %v1705 = vpow.pop %v1704
    %v1706 = vadd.f32 %v1705, 1.0
    %v1707 = vrcp.pop %v1706
    %v1708 = vmul.f32 1.0, %v1707
    %v1709 = vxor.u32 %v1659, 2147483648
    %v1710 = vmul.f32 %v1709, 1.442695
    %v1711 = vpow.pop %v1710
    %v1712 = vadd.f32 %v1711, 1.0
    %v1713 = vrcp.pop %v1712
    %v1714 = vmul.f32 1.0, %v1713
    %v1715 = vmul.f32 %v1708, %v123
    %v1716 = vadd.f32 %v1698, %v1715
    %v1717 = vtanh.pop %v1716
    %v1718 = vsub.f32 1.0, %v1714
    %v1719 = vmul.f32 %v1718, %v1717
    %v1720 = vpack.c.bf16 %v1719, %v1719
    %v1721 = vld [vmem:[%s6] sm:$0xf]
    %v1722 = vld [vmem:[%s6 + $0x4] sm:$0xf]
    %v1723 = vld [vmem:[%s6 + $0x8] sm:$0xf]
    %v1724 = vld [vmem:[%s6 + $0xc] sm:$0xf]
    %v1725 = vld [vmem:[%s6 + $0x10] sm:$0xf]
    %v1726 = vld [vmem:[%s6 + $0x14] sm:$0xf]
    %v1727 = vld [vmem:[%s6 + $0x18] sm:$0xf]
    %v1728 = vld [vmem:[%s6 + $0x1c] sm:$0xf]
    %v1729 = vld [vmem:[%s6 + $0x20] sm:$0xf]
    %v1730 = vld [vmem:[%s6 + $0x24] sm:$0xf]
    %v1731 = vld [vmem:[%s6 + $0x28] sm:$0xf]
    %v1732 = vld [vmem:[%s6 + $0x2c] sm:$0xf]
    %v1733 = vld [vmem:[%s6 + $0x30] sm:$0xf]
    %v1734 = vld [vmem:[%s6 + $0x34] sm:$0xf]
    %v1735 = vld [vmem:[%s6 + $0x38] sm:$0xf]
    %v1736 = vld [vmem:[%s6 + $0x3c] sm:$0xf]
    %v1753 = vunpack.c.l.b16 %v1721
    %v1754 = vunpack.c.l.b16 %v1722
    %v1755 = vunpack.c.l.b16 %v1723
    %v1756 = vunpack.c.l.b16 %v1724
    %v1757 = vunpack.c.l.b16 %v1725
    %v1758 = vunpack.c.l.b16 %v1726
    %v1759 = vunpack.c.l.b16 %v1727
    %v1760 = vunpack.c.l.b16 %v1728
    %v1761 = vunpack.c.l.b16 %v1729
    %v1762 = vunpack.c.l.b16 %v1730
    %v1763 = vunpack.c.l.b16 %v1731
    %v1764 = vunpack.c.l.b16 %v1732
    %v1765 = vunpack.c.l.b16 %v1733
    %v1766 = vunpack.c.l.b16 %v1734
    %v1767 = vunpack.c.l.b16 %v1735
    %v1768 = vunpack.c.l.b16 %v1736
    %v1769 = vpack.c.b16 %v1754, %v1753
    %v1770 = vpack.c.b16 %v1756, %v1755
    %v1771 = vpack.c.b16 %v1758, %v1757
    %v1772 = vpack.c.b16 %v1760, %v1759
    %v1773 = vpack.c.b16 %v1762, %v1761
    %v1774 = vpack.c.b16 %v1764, %v1763
    %v1775 = vpack.c.b16 %v1766, %v1765
    %v1776 = vpack.c.b16 %v1768, %v1767
    %1785 = vmatprep.subr.bf16.mxu0 0
    %1786 = vmatpush1.bf16.msra.mxu0 %v1776
    %1787 = vmatprep.subr.bf16.mxu0 0
    %1788 = vmatpush1.bf16.msra.mxu0 %v1775
    %1789 = vmatprep.subr.bf16.mxu0 0
    %1790 = vmatpush1.bf16.msra.mxu0 %v1774
    %1791 = vmatprep.subr.bf16.mxu0 0
    %1792 = vmatpush1.bf16.msra.mxu0 %v1773
    %1793 = vmatprep.subr.bf16.mxu0 0
    %1794 = vmatpush1.bf16.msra.mxu0 %v1772
    %1795 = vmatprep.subr.bf16.mxu0 0
    %1796 = vmatpush1.bf16.msra.mxu0 %v1771
    %1797 = vmatprep.subr.bf16.mxu0 0
    %1798 = vmatpush1.bf16.msra.mxu0 %v1770
    %1799 = vmatprep.subr.bf16.mxu0 0
    %1800 = vmatpush1.bf16.msra.mxu0 %v1769
    %1801 = vmatprep.subr.bf16.mxu0 0
    %1802 = vmatpush2.bf16.msra.mxu0 0
    %1803 = vmatprep.subr.bf16.mxu0 0
    %1804 = vmatpush2.bf16.msra.mxu0 0
    %1805 = vmatprep.subr.bf16.mxu0 0
    %1806 = vmatpush2.bf16.msra.mxu0 0
    %1807 = vmatprep.subr.bf16.mxu0 0
    %1808 = vmatpush2.bf16.msra.mxu0 0
    %1809 = vmatprep.subr.bf16.mxu0 0
    %1810 = vmatpush2.bf16.msra.mxu0 0
    %1811 = vmatprep.subr.bf16.mxu0 0
    %1812 = vmatpush2.bf16.msra.mxu0 0
    %1813 = vmatprep.subr.bf16.mxu0 0
    %1814 = vmatpush2.bf16.msra.mxu0 0
    %1815 = vmatprep.subr.bf16.mxu0 0
    %1816 = vmatpush2.bf16.msra.mxu0 0
    %1817 = vmatprep.mubr.bf16.mxu0 0
    %1818 = vmatmul.mubr.bf16.gmra.mxu0 %v1720
    %v1819 = vpop.f32.mrf.mxu0
    %v1820 = vadd.f32 %v124, %v1819
    %v1821 = vpop.f32.mrf.mxu0
    %v1822 = vpop.f32.mrf.mxu0
    %v1823 = vpop.f32.mrf.mxu0
    %1824 = vdwg.mxu0
    %v1825 = vmax.f32 %v1820, 0.0
    %v1826 = vpack.c.bf16 %v1825, %v1825
    %v1827 = vld [vmem:[#allocation10] sm:$0xf]
    %v1828 = vld [vmem:[#allocation10 + $0x4] sm:$0xf]
    %v1829 = vld [vmem:[#allocation10 + $0x8] sm:$0xf]
    %v1830 = vld [vmem:[#allocation10 + $0xc] sm:$0xf]
    %v1831 = vld [vmem:[#allocation10 + $0x10] sm:$0xf]
    %v1832 = vld [vmem:[#allocation10 + $0x14] sm:$0xf]
    %v1833 = vld [vmem:[#allocation10 + $0x18] sm:$0xf]
    %v1834 = vld [vmem:[#allocation10 + $0x1c] sm:$0xf]
    %v1843 = vunpack.c.l.b16 %v1827
    %v1844 = vunpack.c.l.b16 %v1828
    %v1845 = vunpack.c.l.b16 %v1829
    %v1846 = vunpack.c.l.b16 %v1830
    %v1847 = vunpack.c.l.b16 %v1831
    %v1848 = vunpack.c.l.b16 %v1832
    %v1849 = vunpack.c.l.b16 %v1833
    %v1850 = vunpack.c.l.b16 %v1834
    %v1851 = vpack.c.b16 %v1844, %v1843
    %v1852 = vpack.c.b16 %v1846, %v1845
    %v1853 = vpack.c.b16 %v1848, %v1847
    %v1854 = vpack.c.b16 %v1850, %v1849
    %v1860 = vsel %vm1371, %v1826, 0
    %1862 = vmatprep.subr.bf16.mxu0 0
    %1863 = vmatpush1.bf16.msra.mxu0 0
    %1864 = vmatprep.subr.bf16.mxu0 0
    %1865 = vmatpush1.bf16.msra.mxu0 0
    %1866 = vmatprep.subr.bf16.mxu0 0
    %1867 = vmatpush1.bf16.msra.mxu0 0
    %1868 = vmatprep.subr.bf16.mxu0 0
    %1869 = vmatpush1.bf16.msra.mxu0 0
    %1870 = vmatprep.subr.bf16.mxu0 0
    %1871 = vmatpush1.bf16.msra.mxu0 %v1854
    %1872 = vmatprep.subr.bf16.mxu0 0
    %1873 = vmatpush1.bf16.msra.mxu0 %v1853
    %1874 = vmatprep.subr.bf16.mxu0 0
    %1875 = vmatpush1.bf16.msra.mxu0 %v1852
    %1876 = vmatprep.subr.bf16.mxu0 0
    %1877 = vmatpush1.bf16.msra.mxu0 %v1851
    %1878 = vmatprep.subr.bf16.mxu0 0
    %1879 = vmatpush2.bf16.msra.mxu0 0
    %1880 = vmatprep.subr.bf16.mxu0 0
    %1881 = vmatpush2.bf16.msra.mxu0 0
    %1882 = vmatprep.subr.bf16.mxu0 0
    %1883 = vmatpush2.bf16.msra.mxu0 0
    %1884 = vmatprep.subr.bf16.mxu0 0
    %1885 = vmatpush2.bf16.msra.mxu0 0
    %1886 = vmatprep.subr.bf16.mxu0 0
    %1887 = vmatpush2.bf16.msra.mxu0 0
    %1888 = vmatprep.subr.bf16.mxu0 0
    %1889 = vmatpush2.bf16.msra.mxu0 0
    %1890 = vmatprep.subr.bf16.mxu0 0
    %1891 = vmatpush2.bf16.msra.mxu0 0
    %1892 = vmatprep.subr.bf16.mxu0 0
    %1893 = vmatpush2.bf16.msra.mxu0 0
    %1894 = vmatprep.mubr.bf16.mxu0 0
    %1895 = vmatmul.mubr.bf16.gmra.mxu0 %v1860
    %v1896 = vpop.f32.mrf.mxu0
    %v1897 = vadd.f32 %v125, %v1896
    %v1898 = vpop.f32.mrf.mxu0
    %v1899 = vpop.f32.mrf.mxu0
    %v1900 = vpop.f32.mrf.mxu0
    %1901 = vdwg.mxu0
    %1902 = vst [vmem:[#allocation13] sm:$0x3] %v1897
    // Predicated region
    $region62: #{tpu_custom_call.1} parent=1 // pred_check
      _
    $region63: #{tpu_custom_call.1} parent=1 // pred_check_branch
      %1904 = sbr.rel (0) target = $region65
    $region64: #{tpu_custom_call.1} parent=1 // pred_region
      %s1906 = ssub.s32 32, 32
      %1907 = vsyncadd [#allocation4], %s1906
      %s1909 = sshll.u32 [#allocation13], 4
      %s1910 = int_to_ptr.vmem [resolvable:$true] %s1909
      %1912 = dma.vmem_to_hbm [thread:$0]  %s1910, 32, %s9, [#allocation4]
    $region65: #{tpu_custom_call.1} parent=1 // pred_fallthru
      _
    // Predicated region
    $region66: #{tpu_custom_call.1} parent=1 // pred_check
      _
    $region67: #{tpu_custom_call.1} parent=1 // pred_check_branch
      %1914 = sbr.rel (0) target = $region69
    $region68: #{tpu_custom_call.1} parent=1 // pred_region
      %1915 = dma.done [#allocation4], 32
    $region69: #{tpu_custom_call.1} parent=1 // pred_fallthru
      _
    %1916 = vsyncpa [#allocation3], 1
    %1917 = vsyncpa [#allocation6], 1
    %1918 = vsyncpa [#allocation9], 1
    %1919 = vsyncpa [#allocation12], 1
    %1920 = vsyncpa [#allocation4], 1

</llo_original>
